<compile_context>
chip_gen: v5e
topology: v5e:2x2
jax: 0.10.0
libtpu: 0.0.40
codegen_flags: <defaults>
</compile_context>

<pallas_src>
import functools

import numpy as np
import jax
import jax.numpy as jnp
from jax import lax
from jax.experimental import pallas as pl
from jax.experimental.pallas import tpu as pltpu

NEG_SLOPE = 0.2


# ---------------------------------------------------------------------------
# Small helpers
# ---------------------------------------------------------------------------
def _leaky(x):
    # Valid for 0 < slope < 1: max(x, slope*x) == leaky_relu(x).
    return jnp.maximum(x, NEG_SLOPE * x)


def _round8(n):
    return (n + 7) // 8 * 8


def _mod_const(x, m):
    """x % m for int32 vectors; bitwise AND when m is a power of two."""
    if m & (m - 1) == 0:
        return jnp.bitwise_and(x, m - 1)
    return lax.rem(x, jnp.int32(m))


@functools.lru_cache(maxsize=None)
def _roll_mode():
    """Probe pltpu.roll's shift convention once with a tiny kernel.

    Returns one of:
      "roll_jnp"  : pltpu.roll(x, s)[p] == x[(p - s) % L]   (jnp.roll convention)
      "roll_pos"  : pltpu.roll(x, s)[p] == x[(p + s) % L]
      "concat"    : fall back to slice+concat shifts.
    """
    def probe(x_ref, o_ref):
        o_ref[...] = pltpu.roll(x_ref[...], 1, axis=1)

    try:
        with jax.ensure_compile_time_eval():
            x = jnp.tile(jnp.arange(128, dtype=jnp.float32)[None, :], (8, 1))
            y = pl.pallas_call(
                probe, out_shape=jax.ShapeDtypeStruct((8, 128), jnp.float32))(x)
            v = float(jax.device_get(y)[0, 0])
    except Exception:
        return "concat"
    if v == 127.0:
        return "roll_jnp"
    if v == 1.0:
        return "roll_pos"
    return "concat"


def _shift_lanes(x, s, mode):
    """y[..., p] = x[..., (p + s) % L]  (circular lane shift; out-of-image taps
    are masked by the caller)."""
    L = x.shape[-1]
    s = s % L
    if s == 0:
        return x
    if mode == "roll_jnp":
        return pltpu.roll(x, L - s, axis=1)
    if mode == "roll_pos":
        return pltpu.roll(x, s, axis=1)
    return jnp.concatenate([x[:, s:], x[:, :s]], axis=1)   # guaranteed fallback


# ---------------------------------------------------------------------------
# Fused kernel: whole 3-block stack, batch folded onto the lane (pixel) axis.
# In-kernel layout: channels on sublanes, N_per_step * H * W pixels on lanes.
# ---------------------------------------------------------------------------
def _apply_block(x, slab_ref, blk, taps_cfg, mode):
    """One ResNeXtBottleneck on a (C, L) value; returns (C_out, L)."""
    (has_sc, Cin, D, Cout, r_wrs, r_brs, r_taps, r_b2, r_w3, r_b3) = blk
    rows_rs = D + Cout if has_sc else D

    w_rs  = slab_ref[r_wrs:r_wrs + rows_rs, 0:Cin]
    b_rs  = slab_ref[r_brs:r_brs + rows_rs, 0:1].astype(jnp.float32)
    w_tap = slab_ref[r_taps:r_taps + D, 0:9 * D]
    b2    = slab_ref[r_b2:r_b2 + D, 0:1].astype(jnp.float32)
    w3    = slab_ref[r_w3:r_w3 + Cout, 0:D]
    b3    = slab_ref[r_b3:r_b3 + Cout, 0:1].astype(jnp.float32)
    mdt   = w_rs.dtype                    # matmul operand dtype (f32 or bf16)

    # 1x1 reduce (+ fused 1x1 shortcut when Cin != Cout): ONE matmul over x.
    y = jnp.dot(w_rs, x.astype(mdt), preferred_element_type=jnp.float32) + b_rs
    if has_sc:
        h = _leaky(y[:D])                 # (D, L)
        s = y[D:]                         # (Cout, L) shortcut-conv output
    else:
        h = _leaky(y)
        s = x                             # identity shortcut (Cin == Cout)

    # Grouped 3x3 (pad=1): stack the 9 shifted+masked taps along the
    # contraction axis and run ONE (D, 9D) @ (9D, L) MXU matmul (K = 72).
    taps = []
    for shift, m in taps_cfg:
        tap = _shift_lanes(h, shift, mode)
        if m is not None:
            tap = jnp.where(m, tap, 0.0)  # elementwise stays f32 (v5e-safe)
        taps.append(tap)
    tap_stack = jnp.concatenate(taps, axis=0).astype(mdt)   # (9D, L)
    h = _leaky(jnp.dot(w_tap, tap_stack,
                       preferred_element_type=jnp.float32) + b2)

    # 1x1 expand (ReZero alpha pre-folded into w3/b3) + residual add.
    return s + jnp.dot(w3, h.astype(mdt), preferred_element_type=jnp.float32) + b3


def _stack_kernel(meta, W, HW, mode, x_ref, slab_ref, out_ref):
    L = x_ref.shape[1]

    # Boundary masks, built ONCE per grid step (grid-/block-invariant).
    # With the batch folded onto lanes, circular-shift bleed between images
    # lands exactly on the masked boundary rows/cols, so this stays correct.
    pix = lax.broadcasted_iota(jnp.int32, (1, L), 1)
    col = _mod_const(pix, W)              # column within the image
    loc = _mod_const(pix, HW)             # pixel index within its image
    row_ge1 = loc >= W                    # row >= 1
    row_leH = loc < HW - W                # row <= H - 2
    col_ge1 = col >= 1
    col_leW = col <= W - 2

    taps_cfg = []                         # (lane shift, mask or None) per tap
    for dh in (-1, 0, 1):
        for dw in (-1, 0, 1):
            m = None
            if dh == -1:
                m = row_ge1
            elif dh == 1:
                m = row_leH
            if dw == -1:
                m = col_ge1 if m is None else jnp.logical_and(m, col_ge1)
            elif dw == 1:
                m = col_leW if m is None else jnp.logical_and(m, col_leW)
            taps_cfg.append((dh * W + dw, m))

    cur = x_ref[...].astype(jnp.float32)
    for blk in meta:                      # statically unrolled over the 3 blocks
        cur = _apply_block(cur, slab_ref, blk, taps_cfg, mode)
    out_ref[...] = cur.astype(out_ref.dtype)


def _auto_num_steps(n_images):
    """v7x: 2 TensorCores per chip -> exactly two 'parallel' grid steps.
    Single-TC v5e/v6e: one big step so the fixed per-step cost is paid once on
    this latency-bound kernel."""
    try:
        kind = jax.devices()[0].device_kind.lower()
    except Exception:
        kind = ""
    if "v7" in kind and n_images >= 2 and n_images % 2 == 0:
        return 2
    return 1


def stacked_resnext_pallas(x_nchw, slab, meta, *, num_steps=None):
    """x_nchw: (N, C_in, H, W)  ->  (N, C_out, H, W)."""
    N, Cin, H, W = x_nchw.shape
    HW = H * W
    Cout = meta[-1][3]
    G = _auto_num_steps(N) if num_steps is None else num_steps
    if N % G:
        G = 1
    L = (N // G) * HW                     # lanes per grid step (multiple of 128)
    mode = _roll_mode()

    # Channels-major with the batch folded onto the 128-lane pixel axis:
    # (N, Cin, H, W) -> (Cin, N*HW).  Every matmul gets an L-wide N dimension
    # and the output store is lane-dense.
    x2 = jnp.transpose(x_nchw.reshape(N, Cin, HW), (1, 0, 2)).reshape(Cin, N * HW)

    out = pl.pallas_call(
        functools.partial(_stack_kernel, meta, W, HW, mode),
        out_shape=jax.ShapeDtypeStruct((Cout, N * HW), x_nchw.dtype),
        grid=(G,),
        in_specs=[pl.BlockSpec((Cin, L), lambda g: (0, g)),
                  pl.BlockSpec(slab.shape, lambda g: (0, 0))],
        out_specs=pl.BlockSpec((Cout, L), lambda g: (0, g)),
        compiler_params=pltpu.CompilerParams(
            dimension_semantics=("parallel",)),
    )(x2, slab)
    return jnp.transpose(out.reshape(Cout, N, HW), (1, 0, 2)).reshape(N, Cout, H, W)


# ---------------------------------------------------------------------------
# One-time weight preparation (NOT per forward call).
# ---------------------------------------------------------------------------
def _grouped_to_tap_matrix(w_oihw, groups):
    """Grouped conv weight (Dout, Din/groups, 3, 3) -> dense (Dout, 9*Din)
    matrix so the 3x3 conv becomes ONE matmul over the stacked shifted taps."""
    w = np.asarray(w_oihw, np.float32)
    Dout, Ding, KH, KW = w.shape
    Din, opg = Ding * groups, Dout // groups
    taps = np.zeros((KH * KW, Dout, Din), np.float32)
    for g in range(groups):
        blk = np.transpose(w[g * opg:(g + 1) * opg], (2, 3, 0, 1))
        taps[:, g * opg:(g + 1) * opg, g * Ding:(g + 1) * Ding] = (
            blk.reshape(KH * KW, opg, Ding))
    return np.transpose(taps, (1, 0, 2)).reshape(Dout, KH * KW * Din)


def prepare_stack(params_list, cardinality, weight_dtype=jnp.float32):
    """Fold shortcut into the reduce matmul and ReZero alpha into the expand
    conv, densify the grouped 3x3 into a (D, 9D) matrix, and pack EVERYTHING
    into a single 2-D slab (one DMA descriptor instead of ~20 tiny inputs).
    Returns (static meta, slab array)."""
    regions, meta, max_cols = [], [], 1
    row = 0

    def add(a):
        nonlocal row, max_cols
        a = np.asarray(a, np.float32)
        if a.ndim == 1:
            a = a.reshape(-1, 1)
        r0 = row
        regions.append((r0, a))
        row = r0 + _round8(a.shape[0])          # keep row offsets 8-aligned
        max_cols = max(max_cols, a.shape[1])
        return r0

    for p in params_list:
        D, Cin = p["w_reduce"].shape[0], p["w_reduce"].shape[1]
        Cout = p["w_expand"].shape[0]
        has_sc = "w_sc" in p
        alpha = float(np.asarray(p["alpha"]).reshape(-1)[0])
        w1 = np.asarray(p["w_reduce"])[:, :, 0, 0]
        b1 = np.asarray(p["b_reduce"])
        if has_sc:
            w_rs = np.concatenate([w1, np.asarray(p["w_sc"])[:, :, 0, 0]], 0)
            b_rs = np.concatenate([b1, np.asarray(p["b_sc"])], 0)
        else:
            w_rs, b_rs = w1, b1
        meta.append((
            has_sc, Cin, D, Cout,
            add(w_rs),                                        # (D [+Cout], Cin)
            add(b_rs),
            add(_grouped_to_tap_matrix(p["w_conv"], cardinality)),  # (D, 9D)
            add(p["b_conv"]),
            add(alpha * np.asarray(p["w_expand"])[:, :, 0, 0]),     # (Cout, D)
            add(alpha * np.asarray(p["b_expand"])),
        ))

    cols = max(128, -(-max_cols // 128) * 128)   # lane-dense slab width
    slab = np.zeros((_round8(row), cols), np.float32)
    for r0, a in regions:
        slab[r0:r0 + a.shape[0], :a.shape[1]] = a
    return tuple(meta), jnp.asarray(slab, weight_dtype)


# ---------------------------------------------------------------------------
# Parameters + pure-JAX reference (lax.conv) for validation.
# ---------------------------------------------------------------------------
def init_bottleneck(key, cin, cout, cardinality, rezero):
    D = cout // 2
    ks = jax.random.split(key, 8)
    p = {
        "w_reduce": 0.1 * jax.random.normal(ks[0], (D, cin, 1, 1), jnp.float32),
        "b_reduce": 0.1 * jax.random.normal(ks[1], (D,), jnp.float32),
        "w_conv":   0.1 * jax.random.normal(ks[2], (D, D // cardinality, 3, 3), jnp.float32),
        "b_conv":   0.1 * jax.random.normal(ks[3], (D,), jnp.float32),
        "w_expand": 0.1 * jax.random.normal(ks[4], (cout, D, 1, 1), jnp.float32),
        "b_expand": 0.1 * jax.random.normal(ks[5], (cout,), jnp.float32),
        "alpha": jnp.zeros((1,), jnp.float32) if rezero else jnp.ones((1,), jnp.float32),
    }
    if cin != cout:
        p["w_sc"] = 0.1 * jax.random.normal(ks[6], (cout, cin, 1, 1), jnp.float32)
        p["b_sc"] = 0.1 * jax.random.normal(ks[7], (cout,), jnp.float32)
    return p


def _conv_ref(x, w, b, groups=1, padding=0):
    y = lax.conv_general_dilated(
        x, w, (1, 1), [(padding, padding)] * 2,
        dimension_numbers=("NCHW", "OIHW", "NCHW"), feature_group_count=groups)
    return y + b[None, :, None, None]


def bottleneck_ref(x_nchw, p, cardinality):
    h = _leaky(_conv_ref(x_nchw, p["w_reduce"], p["b_reduce"]))
    h = _leaky(_conv_ref(h, p["w_conv"], p["b_conv"], groups=cardinality, padding=1))
    h = _conv_ref(h, p["w_expand"], p["b_expand"])
    s = _conv_ref(x_nchw, p["w_sc"], p["b_sc"]) if "w_sc" in p else x_nchw
    return s + p["alpha"][0] * h


# ---------------------------------------------------------------------------
if __name__ == "__main__":
    N, CIN, COUT, H, W = 2, 8, 16, 16, 16
    CARD = 4

    key = jax.random.PRNGKey(0)
    kx, k1, k2, k3 = jax.random.split(key, 4)
    x = jax.random.normal(kx, (N, CIN, H, W), jnp.float32)   # PyTorch-style NCHW

    def make_stack(rezero, alpha_override=None):
        params = [init_bottleneck(k1, CIN, COUT, CARD, rezero),
                  init_bottleneck(k2, COUT, COUT, CARD, rezero),
                  init_bottleneck(k3, COUT, COUT, CARD, rezero)]
        if alpha_override is not None:
            for p in params:
                p["alpha"] = jnp.full((1,), alpha_override, jnp.float32)
        return params

    stacks = [("rezero=False", make_stack(False)),
              ("rezero=True", make_stack(True)),
              ("alpha=0.5", make_stack(False, 0.5))]

    # All test stacks share the same static meta -> a single compiled kernel.
    meta0, _ = prepare_stack(stacks[0][1], CARD)
    fwd = jax.jit(lambda xx, sl: stacked_resnext_pallas(xx, sl, meta0))

    for name, params in stacks:
        meta, slab = prepare_stack(params, CARD)     # one-time re-layout
        assert meta == meta0
        out = jax.block_until_ready(fwd(x, slab))
        ref = x
        for p in params:
            ref = bottleneck_ref(ref, p, CARD)
        np.testing.assert_allclose(np.asarray(out), np.asarray(ref),
                                   rtol=1e-4, atol=1e-4, err_msg=name)

    # Optional bf16-MXU path (native rate on v6e/v7x); loose smoke check only.
    _, slab_bf16 = prepare_stack(stacks[0][1], CARD, weight_dtype=jnp.bfloat16)
    out_b = jax.block_until_ready(fwd(x, slab_bf16))
    ref0 = x
    for p in stacks[0][1]:
        ref0 = bottleneck_ref(ref0, p, CARD)
    np.testing.assert_allclose(np.asarray(out_b), np.asarray(ref0),
                               rtol=5e-2, atol=5e-2, err_msg="bf16 weights")

    print("KERNEL_OK")
</pallas_src>

<mosaic_0001>
module attributes {stable_mosaic.version = 11 : i64} {
  func.func @_stack_kernel(%arg0: i32, %arg1: memref<8x512xf32, #tpu.memory_space<vmem>>, %arg2: memref<224x128xf32, #tpu.memory_space<vmem>>, %arg3: memref<16x512xf32, #tpu.memory_space<vmem>>) attributes {dimension_semantics = [#tpu.dimension_semantics<parallel>], iteration_bounds = array<i64: 1>, scalar_prefetch = 0 : i64, scratch_operands = 0 : i64, tpu.core_type = #tpu.core_type<tc>, window_params = [{transform_indices = @transform_0, window_bounds = array<i64: 8, 512>}, {pipeline_mode = #tpu.pipeline_mode<synchronous>, transform_indices = @transform_1, window_bounds = array<i64: 224, 128>}, {transform_indices = @transform_2, window_bounds = array<i64: 16, 512>}]} {
    %0 = tpu.iota {dimensions = array<i32: 1>} : vector<1x512xi32>
    %c15_i32 = arith.constant 15 : i32
    %1 = vector.broadcast %c15_i32 : i32 to vector<1x512xi32>
    %2 = arith.andi %0, %1 : vector<1x512xi32>
    %c255_i32 = arith.constant 255 : i32
    %3 = vector.broadcast %c255_i32 : i32 to vector<1x512xi32>
    %4 = arith.andi %0, %3 : vector<1x512xi32>
    %c16_i32 = arith.constant 16 : i32
    %5 = vector.broadcast %c16_i32 : i32 to vector<1x512xi32>
    %6 = arith.cmpi sge, %4, %5 : vector<1x512xi32>
    %c240_i32 = arith.constant 240 : i32
    %7 = vector.broadcast %c240_i32 : i32 to vector<1x512xi32>
    %8 = arith.cmpi slt, %4, %7 : vector<1x512xi32>
    %c1_i32 = arith.constant 1 : i32
    %9 = vector.broadcast %c1_i32 : i32 to vector<1x512xi32>
    %10 = arith.cmpi sge, %2, %9 : vector<1x512xi32>
    %c14_i32 = arith.constant 14 : i32
    %11 = vector.broadcast %c14_i32 : i32 to vector<1x512xi32>
    %12 = arith.cmpi sle, %2, %11 : vector<1x512xi32>
    %13 = arith.andi %6, %10 : vector<1x512xi1>
    %14 = arith.andi %6, %12 : vector<1x512xi1>
    %15 = arith.andi %8, %10 : vector<1x512xi1>
    %16 = arith.andi %8, %12 : vector<1x512xi1>
    %c0 = arith.constant 0 : index
    %c0_0 = arith.constant 0 : index
    %17 = vector.load %arg1[%c0, %c0_0] : memref<8x512xf32, #tpu.memory_space<vmem>>, vector<8x512xf32>
    %c0_1 = arith.constant 0 : index
    %c0_2 = arith.constant 0 : index
    %18 = vector.load %arg2[%c0_1, %c0_2] : memref<224x128xf32, #tpu.memory_space<vmem>>, vector<24x8xf32>
    %c24 = arith.constant 24 : index
    %c0_3 = arith.constant 0 : index
    %19 = vector.load %arg2[%c24, %c0_3] : memref<224x128xf32, #tpu.memory_space<vmem>>, vector<24x1xf32>
    %c48 = arith.constant 48 : index
    %c0_4 = arith.constant 0 : index
    %20 = vector.load %arg2[%c48, %c0_4] : memref<224x128xf32, #tpu.memory_space<vmem>>, vector<8x72xf32>
    %c56 = arith.constant 56 : index
    %c0_5 = arith.constant 0 : index
    %21 = vector.load %arg2[%c56, %c0_5] : memref<224x128xf32, #tpu.memory_space<vmem>>, vector<8x1xf32>
    %c64 = arith.constant 64 : index
    %c0_6 = arith.constant 0 : index
    %22 = vector.load %arg2[%c64, %c0_6] : memref<224x128xf32, #tpu.memory_space<vmem>>, vector<16x8xf32>
    %c80 = arith.constant 80 : index
    %c0_7 = arith.constant 0 : index
    %23 = vector.load %arg2[%c80, %c0_7] : memref<224x128xf32, #tpu.memory_space<vmem>>, vector<16x1xf32>
    %cst = arith.constant dense<0.000000e+00> : vector<24x512xf32>
    %24 = tpu.matmul %18, %17, %cst {dimension_numbers = #tpu.dot_dimension_numbers<[1], [0], [0], [1], [0, 0, 1, 1], [], []>} : vector<24x8xf32>, vector<8x512xf32>, vector<24x512xf32> -> vector<24x512xf32>
    %25 = vector.broadcast %19 : vector<24x1xf32> to vector<24x512xf32>
    %26 = arith.addf %24, %25 : vector<24x512xf32>
    %27 = vector.extract_strided_slice %26 {offsets = [0, 0], sizes = [8, 512], strides = [1, 1]} : vector<24x512xf32> to vector<8x512xf32>
    %cst_8 = arith.constant 2.000000e-01 : f32
    %28 = vector.broadcast %cst_8 : f32 to vector<8x512xf32>
    %29 = arith.mulf %28, %27 : vector<8x512xf32>
    %30 = arith.maximumf %27, %29 : vector<8x512xf32>
    %31 = vector.extract_strided_slice %26 {offsets = [8, 0], sizes = [16, 512], strides = [1, 1]} : vector<24x512xf32> to vector<16x512xf32>
    %32 = vector.extract_strided_slice %30 {offsets = [0, 495], sizes = [8, 17], strides = [1, 1]} : vector<8x512xf32> to vector<8x17xf32>
    %33 = vector.extract_strided_slice %30 {offsets = [0, 0], sizes = [8, 495], strides = [1, 1]} : vector<8x512xf32> to vector<8x495xf32>
    %34 = tpu.concatenate %32, %33 in 1 : vector<8x17xf32>, vector<8x495xf32> -> vector<8x512xf32>
    %cst_9 = arith.constant 0.000000e+00 : f32
    %35 = vector.shape_cast %13 : vector<1x512xi1> to vector<1x512xi1>
    %36 = vector.broadcast %35 : vector<1x512xi1> to vector<8x512xi1>
    %37 = vector.broadcast %cst_9 : f32 to vector<8x512xf32>
    %38 = arith.select %36, %34, %37 : vector<8x512xi1>, vector<8x512xf32>
    %39 = vector.extract_strided_slice %30 {offsets = [0, 496], sizes = [8, 16], strides = [1, 1]} : vector<8x512xf32> to vector<8x16xf32>
    %40 = vector.extract_strided_slice %30 {offsets = [0, 0], sizes = [8, 496], strides = [1, 1]} : vector<8x512xf32> to vector<8x496xf32>
    %41 = tpu.concatenate %39, %40 in 1 : vector<8x16xf32>, vector<8x496xf32> -> vector<8x512xf32>
    %cst_10 = arith.constant 0.000000e+00 : f32
    %42 = vector.shape_cast %6 : vector<1x512xi1> to vector<1x512xi1>
    %43 = vector.broadcast %42 : vector<1x512xi1> to vector<8x512xi1>
    %44 = vector.broadcast %cst_10 : f32 to vector<8x512xf32>
    %45 = arith.select %43, %41, %44 : vector<8x512xi1>, vector<8x512xf32>
    %46 = vector.extract_strided_slice %30 {offsets = [0, 497], sizes = [8, 15], strides = [1, 1]} : vector<8x512xf32> to vector<8x15xf32>
    %47 = vector.extract_strided_slice %30 {offsets = [0, 0], sizes = [8, 497], strides = [1, 1]} : vector<8x512xf32> to vector<8x497xf32>
    %48 = tpu.concatenate %46, %47 in 1 : vector<8x15xf32>, vector<8x497xf32> -> vector<8x512xf32>
    %cst_11 = arith.constant 0.000000e+00 : f32
    %49 = vector.shape_cast %14 : vector<1x512xi1> to vector<1x512xi1>
    %50 = vector.broadcast %49 : vector<1x512xi1> to vector<8x512xi1>
    %51 = vector.broadcast %cst_11 : f32 to vector<8x512xf32>
    %52 = arith.select %50, %48, %51 : vector<8x512xi1>, vector<8x512xf32>
    %53 = vector.extract_strided_slice %30 {offsets = [0, 511], sizes = [8, 1], strides = [1, 1]} : vector<8x512xf32> to vector<8x1xf32>
    %54 = vector.extract_strided_slice %30 {offsets = [0, 0], sizes = [8, 511], strides = [1, 1]} : vector<8x512xf32> to vector<8x511xf32>
    %55 = tpu.concatenate %53, %54 in 1 : vector<8x1xf32>, vector<8x511xf32> -> vector<8x512xf32>
    %cst_12 = arith.constant 0.000000e+00 : f32
    %56 = vector.shape_cast %10 : vector<1x512xi1> to vector<1x512xi1>
    %57 = vector.broadcast %56 : vector<1x512xi1> to vector<8x512xi1>
    %58 = vector.broadcast %cst_12 : f32 to vector<8x512xf32>
    %59 = arith.select %57, %55, %58 : vector<8x512xi1>, vector<8x512xf32>
    %60 = vector.extract_strided_slice %30 {offsets = [0, 1], sizes = [8, 511], strides = [1, 1]} : vector<8x512xf32> to vector<8x511xf32>
    %61 = vector.extract_strided_slice %30 {offsets = [0, 0], sizes = [8, 1], strides = [1, 1]} : vector<8x512xf32> to vector<8x1xf32>
    %62 = tpu.concatenate %60, %61 in 1 : vector<8x511xf32>, vector<8x1xf32> -> vector<8x512xf32>
    %cst_13 = arith.constant 0.000000e+00 : f32
    %63 = vector.shape_cast %12 : vector<1x512xi1> to vector<1x512xi1>
    %64 = vector.broadcast %63 : vector<1x512xi1> to vector<8x512xi1>
    %65 = vector.broadcast %cst_13 : f32 to vector<8x512xf32>
    %66 = arith.select %64, %62, %65 : vector<8x512xi1>, vector<8x512xf32>
    %67 = vector.extract_strided_slice %30 {offsets = [0, 15], sizes = [8, 497], strides = [1, 1]} : vector<8x512xf32> to vector<8x497xf32>
    %68 = vector.extract_strided_slice %30 {offsets = [0, 0], sizes = [8, 15], strides = [1, 1]} : vector<8x512xf32> to vector<8x15xf32>
    %69 = tpu.concatenate %67, %68 in 1 : vector<8x497xf32>, vector<8x15xf32> -> vector<8x512xf32>
    %cst_14 = arith.constant 0.000000e+00 : f32
    %70 = vector.shape_cast %15 : vector<1x512xi1> to vector<1x512xi1>
    %71 = vector.broadcast %70 : vector<1x512xi1> to vector<8x512xi1>
    %72 = vector.broadcast %cst_14 : f32 to vector<8x512xf32>
    %73 = arith.select %71, %69, %72 : vector<8x512xi1>, vector<8x512xf32>
    %74 = vector.extract_strided_slice %30 {offsets = [0, 16], sizes = [8, 496], strides = [1, 1]} : vector<8x512xf32> to vector<8x496xf32>
    %75 = vector.extract_strided_slice %30 {offsets = [0, 0], sizes = [8, 16], strides = [1, 1]} : vector<8x512xf32> to vector<8x16xf32>
    %76 = tpu.concatenate %74, %75 in 1 : vector<8x496xf32>, vector<8x16xf32> -> vector<8x512xf32>
    %cst_15 = arith.constant 0.000000e+00 : f32
    %77 = vector.shape_cast %8 : vector<1x512xi1> to vector<1x512xi1>
    %78 = vector.broadcast %77 : vector<1x512xi1> to vector<8x512xi1>
    %79 = vector.broadcast %cst_15 : f32 to vector<8x512xf32>
    %80 = arith.select %78, %76, %79 : vector<8x512xi1>, vector<8x512xf32>
    %81 = vector.extract_strided_slice %30 {offsets = [0, 17], sizes = [8, 495], strides = [1, 1]} : vector<8x512xf32> to vector<8x495xf32>
    %82 = vector.extract_strided_slice %30 {offsets = [0, 0], sizes = [8, 17], strides = [1, 1]} : vector<8x512xf32> to vector<8x17xf32>
    %83 = tpu.concatenate %81, %82 in 1 : vector<8x495xf32>, vector<8x17xf32> -> vector<8x512xf32>
    %cst_16 = arith.constant 0.000000e+00 : f32
    %84 = vector.shape_cast %16 : vector<1x512xi1> to vector<1x512xi1>
    %85 = vector.broadcast %84 : vector<1x512xi1> to vector<8x512xi1>
    %86 = vector.broadcast %cst_16 : f32 to vector<8x512xf32>
    %87 = arith.select %85, %83, %86 : vector<8x512xi1>, vector<8x512xf32>
    %88 = tpu.concatenate %38, %45, %52, %59, %30, %66, %73, %80, %87 in 0 : vector<8x512xf32>, vector<8x512xf32>, vector<8x512xf32>, vector<8x512xf32>, vector<8x512xf32>, vector<8x512xf32>, vector<8x512xf32>, vector<8x512xf32>, vector<8x512xf32> -> vector<72x512xf32>
    %cst_17 = arith.constant dense<0.000000e+00> : vector<8x512xf32>
    %89 = tpu.matmul %20, %88, %cst_17 {dimension_numbers = #tpu.dot_dimension_numbers<[1], [0], [0], [1], [0, 0, 1, 1], [], []>} : vector<8x72xf32>, vector<72x512xf32>, vector<8x512xf32> -> vector<8x512xf32>
    %90 = vector.broadcast %21 : vector<8x1xf32> to vector<8x512xf32>
    %91 = arith.addf %89, %90 : vector<8x512xf32>
    %cst_18 = arith.constant 2.000000e-01 : f32
    %92 = vector.broadcast %cst_18 : f32 to vector<8x512xf32>
    %93 = arith.mulf %92, %91 : vector<8x512xf32>
    %94 = arith.maximumf %91, %93 : vector<8x512xf32>
    %cst_19 = arith.constant dense<0.000000e+00> : vector<16x512xf32>
    %95 = tpu.matmul %22, %94, %cst_19 {dimension_numbers = #tpu.dot_dimension_numbers<[1], [0], [0], [1], [0, 0, 1, 1], [], []>} : vector<16x8xf32>, vector<8x512xf32>, vector<16x512xf32> -> vector<16x512xf32>
    %96 = arith.addf %31, %95 : vector<16x512xf32>
    %97 = vector.broadcast %23 : vector<16x1xf32> to vector<16x512xf32>
    %98 = arith.addf %96, %97 : vector<16x512xf32>
    %c96 = arith.constant 96 : index
    %c0_20 = arith.constant 0 : index
    %99 = vector.load %arg2[%c96, %c0_20] : memref<224x128xf32, #tpu.memory_space<vmem>>, vector<8x16xf32>
    %c104 = arith.constant 104 : index
    %c0_21 = arith.constant 0 : index
    %100 = vector.load %arg2[%c104, %c0_21] : memref<224x128xf32, #tpu.memory_space<vmem>>, vector<8x1xf32>
    %c112 = arith.constant 112 : index
    %c0_22 = arith.constant 0 : index
    %101 = vector.load %arg2[%c112, %c0_22] : memref<224x128xf32, #tpu.memory_space<vmem>>, vector<8x72xf32>
    %c120 = arith.constant 120 : index
    %c0_23 = arith.constant 0 : index
    %102 = vector.load %arg2[%c120, %c0_23] : memref<224x128xf32, #tpu.memory_space<vmem>>, vector<8x1xf32>
    %c128 = arith.constant 128 : index
    %c0_24 = arith.constant 0 : index
    %103 = vector.load %arg2[%c128, %c0_24] : memref<224x128xf32, #tpu.memory_space<vmem>>, vector<16x8xf32>
    %c144 = arith.constant 144 : index
    %c0_25 = arith.constant 0 : index
    %104 = vector.load %arg2[%c144, %c0_25] : memref<224x128xf32, #tpu.memory_space<vmem>>, vector<16x1xf32>
    %cst_26 = arith.constant dense<0.000000e+00> : vector<8x512xf32>
    %105 = tpu.matmul %99, %98, %cst_26 {dimension_numbers = #tpu.dot_dimension_numbers<[1], [0], [0], [1], [0, 0, 1, 1], [], []>} : vector<8x16xf32>, vector<16x512xf32>, vector<8x512xf32> -> vector<8x512xf32>
    %106 = vector.broadcast %100 : vector<8x1xf32> to vector<8x512xf32>
    %107 = arith.addf %105, %106 : vector<8x512xf32>
    %cst_27 = arith.constant 2.000000e-01 : f32
    %108 = vector.broadcast %cst_27 : f32 to vector<8x512xf32>
    %109 = arith.mulf %108, %107 : vector<8x512xf32>
    %110 = arith.maximumf %107, %109 : vector<8x512xf32>
    %111 = vector.extract_strided_slice %110 {offsets = [0, 495], sizes = [8, 17], strides = [1, 1]} : vector<8x512xf32> to vector<8x17xf32>
    %112 = vector.extract_strided_slice %110 {offsets = [0, 0], sizes = [8, 495], strides = [1, 1]} : vector<8x512xf32> to vector<8x495xf32>
    %113 = tpu.concatenate %111, %112 in 1 : vector<8x17xf32>, vector<8x495xf32> -> vector<8x512xf32>
    %cst_28 = arith.constant 0.000000e+00 : f32
    %114 = vector.shape_cast %13 : vector<1x512xi1> to vector<1x512xi1>
    %115 = vector.broadcast %114 : vector<1x512xi1> to vector<8x512xi1>
    %116 = vector.broadcast %cst_28 : f32 to vector<8x512xf32>
    %117 = arith.select %115, %113, %116 : vector<8x512xi1>, vector<8x512xf32>
    %118 = vector.extract_strided_slice %110 {offsets = [0, 496], sizes = [8, 16], strides = [1, 1]} : vector<8x512xf32> to vector<8x16xf32>
    %119 = vector.extract_strided_slice %110 {offsets = [0, 0], sizes = [8, 496], strides = [1, 1]} : vector<8x512xf32> to vector<8x496xf32>
    %120 = tpu.concatenate %118, %119 in 1 : vector<8x16xf32>, vector<8x496xf32> -> vector<8x512xf32>
    %cst_29 = arith.constant 0.000000e+00 : f32
    %121 = vector.shape_cast %6 : vector<1x512xi1> to vector<1x512xi1>
    %122 = vector.broadcast %121 : vector<1x512xi1> to vector<8x512xi1>
    %123 = vector.broadcast %cst_29 : f32 to vector<8x512xf32>
    %124 = arith.select %122, %120, %123 : vector<8x512xi1>, vector<8x512xf32>
    %125 = vector.extract_strided_slice %110 {offsets = [0, 497], sizes = [8, 15], strides = [1, 1]} : vector<8x512xf32> to vector<8x15xf32>
    %126 = vector.extract_strided_slice %110 {offsets = [0, 0], sizes = [8, 497], strides = [1, 1]} : vector<8x512xf32> to vector<8x497xf32>
    %127 = tpu.concatenate %125, %126 in 1 : vector<8x15xf32>, vector<8x497xf32> -> vector<8x512xf32>
    %cst_30 = arith.constant 0.000000e+00 : f32
    %128 = vector.shape_cast %14 : vector<1x512xi1> to vector<1x512xi1>
    %129 = vector.broadcast %128 : vector<1x512xi1> to vector<8x512xi1>
    %130 = vector.broadcast %cst_30 : f32 to vector<8x512xf32>
    %131 = arith.select %129, %127, %130 : vector<8x512xi1>, vector<8x512xf32>
    %132 = vector.extract_strided_slice %110 {offsets = [0, 511], sizes = [8, 1], strides = [1, 1]} : vector<8x512xf32> to vector<8x1xf32>
    %133 = vector.extract_strided_slice %110 {offsets = [0, 0], sizes = [8, 511], strides = [1, 1]} : vector<8x512xf32> to vector<8x511xf32>
    %134 = tpu.concatenate %132, %133 in 1 : vector<8x1xf32>, vector<8x511xf32> -> vector<8x512xf32>
    %cst_31 = arith.constant 0.000000e+00 : f32
    %135 = vector.shape_cast %10 : vector<1x512xi1> to vector<1x512xi1>
    %136 = vector.broadcast %135 : vector<1x512xi1> to vector<8x512xi1>
    %137 = vector.broadcast %cst_31 : f32 to vector<8x512xf32>
    %138 = arith.select %136, %134, %137 : vector<8x512xi1>, vector<8x512xf32>
    %139 = vector.extract_strided_slice %110 {offsets = [0, 1], sizes = [8, 511], strides = [1, 1]} : vector<8x512xf32> to vector<8x511xf32>
    %140 = vector.extract_strided_slice %110 {offsets = [0, 0], sizes = [8, 1], strides = [1, 1]} : vector<8x512xf32> to vector<8x1xf32>
    %141 = tpu.concatenate %139, %140 in 1 : vector<8x511xf32>, vector<8x1xf32> -> vector<8x512xf32>
    %cst_32 = arith.constant 0.000000e+00 : f32
    %142 = vector.shape_cast %12 : vector<1x512xi1> to vector<1x512xi1>
    %143 = vector.broadcast %142 : vector<1x512xi1> to vector<8x512xi1>
    %144 = vector.broadcast %cst_32 : f32 to vector<8x512xf32>
    %145 = arith.select %143, %141, %144 : vector<8x512xi1>, vector<8x512xf32>
    %146 = vector.extract_strided_slice %110 {offsets = [0, 15], sizes = [8, 497], strides = [1, 1]} : vector<8x512xf32> to vector<8x497xf32>
    %147 = vector.extract_strided_slice %110 {offsets = [0, 0], sizes = [8, 15], strides = [1, 1]} : vector<8x512xf32> to vector<8x15xf32>
    %148 = tpu.concatenate %146, %147 in 1 : vector<8x497xf32>, vector<8x15xf32> -> vector<8x512xf32>
    %cst_33 = arith.constant 0.000000e+00 : f32
    %149 = vector.shape_cast %15 : vector<1x512xi1> to vector<1x512xi1>
    %150 = vector.broadcast %149 : vector<1x512xi1> to vector<8x512xi1>
    %151 = vector.broadcast %cst_33 : f32 to vector<8x512xf32>
    %152 = arith.select %150, %148, %151 : vector<8x512xi1>, vector<8x512xf32>
    %153 = vector.extract_strided_slice %110 {offsets = [0, 16], sizes = [8, 496], strides = [1, 1]} : vector<8x512xf32> to vector<8x496xf32>
    %154 = vector.extract_strided_slice %110 {offsets = [0, 0], sizes = [8, 16], strides = [1, 1]} : vector<8x512xf32> to vector<8x16xf32>
    %155 = tpu.concatenate %153, %154 in 1 : vector<8x496xf32>, vector<8x16xf32> -> vector<8x512xf32>
    %cst_34 = arith.constant 0.000000e+00 : f32
    %156 = vector.shape_cast %8 : vector<1x512xi1> to vector<1x512xi1>
    %157 = vector.broadcast %156 : vector<1x512xi1> to vector<8x512xi1>
    %158 = vector.broadcast %cst_34 : f32 to vector<8x512xf32>
    %159 = arith.select %157, %155, %158 : vector<8x512xi1>, vector<8x512xf32>
    %160 = vector.extract_strided_slice %110 {offsets = [0, 17], sizes = [8, 495], strides = [1, 1]} : vector<8x512xf32> to vector<8x495xf32>
    %161 = vector.extract_strided_slice %110 {offsets = [0, 0], sizes = [8, 17], strides = [1, 1]} : vector<8x512xf32> to vector<8x17xf32>
    %162 = tpu.concatenate %160, %161 in 1 : vector<8x495xf32>, vector<8x17xf32> -> vector<8x512xf32>
    %cst_35 = arith.constant 0.000000e+00 : f32
    %163 = vector.shape_cast %16 : vector<1x512xi1> to vector<1x512xi1>
    %164 = vector.broadcast %163 : vector<1x512xi1> to vector<8x512xi1>
    %165 = vector.broadcast %cst_35 : f32 to vector<8x512xf32>
    %166 = arith.select %164, %162, %165 : vector<8x512xi1>, vector<8x512xf32>
    %167 = tpu.concatenate %117, %124, %131, %138, %110, %145, %152, %159, %166 in 0 : vector<8x512xf32>, vector<8x512xf32>, vector<8x512xf32>, vector<8x512xf32>, vector<8x512xf32>, vector<8x512xf32>, vector<8x512xf32>, vector<8x512xf32>, vector<8x512xf32> -> vector<72x512xf32>
    %cst_36 = arith.constant dense<0.000000e+00> : vector<8x512xf32>
    %168 = tpu.matmul %101, %167, %cst_36 {dimension_numbers = #tpu.dot_dimension_numbers<[1], [0], [0], [1], [0, 0, 1, 1], [], []>} : vector<8x72xf32>, vector<72x512xf32>, vector<8x512xf32> -> vector<8x512xf32>
    %169 = vector.broadcast %102 : vector<8x1xf32> to vector<8x512xf32>
    %170 = arith.addf %168, %169 : vector<8x512xf32>
    %cst_37 = arith.constant 2.000000e-01 : f32
    %171 = vector.broadcast %cst_37 : f32 to vector<8x512xf32>
    %172 = arith.mulf %171, %170 : vector<8x512xf32>
    %173 = arith.maximumf %170, %172 : vector<8x512xf32>
    %cst_38 = arith.constant dense<0.000000e+00> : vector<16x512xf32>
    %174 = tpu.matmul %103, %173, %cst_38 {dimension_numbers = #tpu.dot_dimension_numbers<[1], [0], [0], [1], [0, 0, 1, 1], [], []>} : vector<16x8xf32>, vector<8x512xf32>, vector<16x512xf32> -> vector<16x512xf32>
    %175 = arith.addf %98, %174 : vector<16x512xf32>
    %176 = vector.broadcast %104 : vector<16x1xf32> to vector<16x512xf32>
    %177 = arith.addf %175, %176 : vector<16x512xf32>
    %c160 = arith.constant 160 : index
    %c0_39 = arith.constant 0 : index
    %178 = vector.load %arg2[%c160, %c0_39] : memref<224x128xf32, #tpu.memory_space<vmem>>, vector<8x16xf32>
    %c168 = arith.constant 168 : index
    %c0_40 = arith.constant 0 : index
    %179 = vector.load %arg2[%c168, %c0_40] : memref<224x128xf32, #tpu.memory_space<vmem>>, vector<8x1xf32>
    %c176 = arith.constant 176 : index
    %c0_41 = arith.constant 0 : index
    %180 = vector.load %arg2[%c176, %c0_41] : memref<224x128xf32, #tpu.memory_space<vmem>>, vector<8x72xf32>
    %c184 = arith.constant 184 : index
    %c0_42 = arith.constant 0 : index
    %181 = vector.load %arg2[%c184, %c0_42] : memref<224x128xf32, #tpu.memory_space<vmem>>, vector<8x1xf32>
    %c192 = arith.constant 192 : index
    %c0_43 = arith.constant 0 : index
    %182 = vector.load %arg2[%c192, %c0_43] : memref<224x128xf32, #tpu.memory_space<vmem>>, vector<16x8xf32>
    %c208 = arith.constant 208 : index
    %c0_44 = arith.constant 0 : index
    %183 = vector.load %arg2[%c208, %c0_44] : memref<224x128xf32, #tpu.memory_space<vmem>>, vector<16x1xf32>
    %cst_45 = arith.constant dense<0.000000e+00> : vector<8x512xf32>
    %184 = tpu.matmul %178, %177, %cst_45 {dimension_numbers = #tpu.dot_dimension_numbers<[1], [0], [0], [1], [0, 0, 1, 1], [], []>} : vector<8x16xf32>, vector<16x512xf32>, vector<8x512xf32> -> vector<8x512xf32>
    %185 = vector.broadcast %179 : vector<8x1xf32> to vector<8x512xf32>
    %186 = arith.addf %184, %185 : vector<8x512xf32>
    %cst_46 = arith.constant 2.000000e-01 : f32
    %187 = vector.broadcast %cst_46 : f32 to vector<8x512xf32>
    %188 = arith.mulf %187, %186 : vector<8x512xf32>
    %189 = arith.maximumf %186, %188 : vector<8x512xf32>
    %190 = vector.extract_strided_slice %189 {offsets = [0, 495], sizes = [8, 17], strides = [1, 1]} : vector<8x512xf32> to vector<8x17xf32>
    %191 = vector.extract_strided_slice %189 {offsets = [0, 0], sizes = [8, 495], strides = [1, 1]} : vector<8x512xf32> to vector<8x495xf32>
    %192 = tpu.concatenate %190, %191 in 1 : vector<8x17xf32>, vector<8x495xf32> -> vector<8x512xf32>
    %cst_47 = arith.constant 0.000000e+00 : f32
    %193 = vector.shape_cast %13 : vector<1x512xi1> to vector<1x512xi1>
    %194 = vector.broadcast %193 : vector<1x512xi1> to vector<8x512xi1>
    %195 = vector.broadcast %cst_47 : f32 to vector<8x512xf32>
    %196 = arith.select %194, %192, %195 : vector<8x512xi1>, vector<8x512xf32>
    %197 = vector.extract_strided_slice %189 {offsets = [0, 496], sizes = [8, 16], strides = [1, 1]} : vector<8x512xf32> to vector<8x16xf32>
    %198 = vector.extract_strided_slice %189 {offsets = [0, 0], sizes = [8, 496], strides = [1, 1]} : vector<8x512xf32> to vector<8x496xf32>
    %199 = tpu.concatenate %197, %198 in 1 : vector<8x16xf32>, vector<8x496xf32> -> vector<8x512xf32>
    %cst_48 = arith.constant 0.000000e+00 : f32
    %200 = vector.shape_cast %6 : vector<1x512xi1> to vector<1x512xi1>
    %201 = vector.broadcast %200 : vector<1x512xi1> to vector<8x512xi1>
    %202 = vector.broadcast %cst_48 : f32 to vector<8x512xf32>
    %203 = arith.select %201, %199, %202 : vector<8x512xi1>, vector<8x512xf32>
    %204 = vector.extract_strided_slice %189 {offsets = [0, 497], sizes = [8, 15], strides = [1, 1]} : vector<8x512xf32> to vector<8x15xf32>
    %205 = vector.extract_strided_slice %189 {offsets = [0, 0], sizes = [8, 497], strides = [1, 1]} : vector<8x512xf32> to vector<8x497xf32>
    %206 = tpu.concatenate %204, %205 in 1 : vector<8x15xf32>, vector<8x497xf32> -> vector<8x512xf32>
    %cst_49 = arith.constant 0.000000e+00 : f32
    %207 = vector.shape_cast %14 : vector<1x512xi1> to vector<1x512xi1>
    %208 = vector.broadcast %207 : vector<1x512xi1> to vector<8x512xi1>
    %209 = vector.broadcast %cst_49 : f32 to vector<8x512xf32>
    %210 = arith.select %208, %206, %209 : vector<8x512xi1>, vector<8x512xf32>
    %211 = vector.extract_strided_slice %189 {offsets = [0, 511], sizes = [8, 1], strides = [1, 1]} : vector<8x512xf32> to vector<8x1xf32>
    %212 = vector.extract_strided_slice %189 {offsets = [0, 0], sizes = [8, 511], strides = [1, 1]} : vector<8x512xf32> to vector<8x511xf32>
    %213 = tpu.concatenate %211, %212 in 1 : vector<8x1xf32>, vector<8x511xf32> -> vector<8x512xf32>
    %cst_50 = arith.constant 0.000000e+00 : f32
    %214 = vector.shape_cast %10 : vector<1x512xi1> to vector<1x512xi1>
    %215 = vector.broadcast %214 : vector<1x512xi1> to vector<8x512xi1>
    %216 = vector.broadcast %cst_50 : f32 to vector<8x512xf32>
    %217 = arith.select %215, %213, %216 : vector<8x512xi1>, vector<8x512xf32>
    %218 = vector.extract_strided_slice %189 {offsets = [0, 1], sizes = [8, 511], strides = [1, 1]} : vector<8x512xf32> to vector<8x511xf32>
    %219 = vector.extract_strided_slice %189 {offsets = [0, 0], sizes = [8, 1], strides = [1, 1]} : vector<8x512xf32> to vector<8x1xf32>
    %220 = tpu.concatenate %218, %219 in 1 : vector<8x511xf32>, vector<8x1xf32> -> vector<8x512xf32>
    %cst_51 = arith.constant 0.000000e+00 : f32
    %221 = vector.shape_cast %12 : vector<1x512xi1> to vector<1x512xi1>
    %222 = vector.broadcast %221 : vector<1x512xi1> to vector<8x512xi1>
    %223 = vector.broadcast %cst_51 : f32 to vector<8x512xf32>
    %224 = arith.select %222, %220, %223 : vector<8x512xi1>, vector<8x512xf32>
    %225 = vector.extract_strided_slice %189 {offsets = [0, 15], sizes = [8, 497], strides = [1, 1]} : vector<8x512xf32> to vector<8x497xf32>
    %226 = vector.extract_strided_slice %189 {offsets = [0, 0], sizes = [8, 15], strides = [1, 1]} : vector<8x512xf32> to vector<8x15xf32>
    %227 = tpu.concatenate %225, %226 in 1 : vector<8x497xf32>, vector<8x15xf32> -> vector<8x512xf32>
    %cst_52 = arith.constant 0.000000e+00 : f32
    %228 = vector.shape_cast %15 : vector<1x512xi1> to vector<1x512xi1>
    %229 = vector.broadcast %228 : vector<1x512xi1> to vector<8x512xi1>
    %230 = vector.broadcast %cst_52 : f32 to vector<8x512xf32>
    %231 = arith.select %229, %227, %230 : vector<8x512xi1>, vector<8x512xf32>
    %232 = vector.extract_strided_slice %189 {offsets = [0, 16], sizes = [8, 496], strides = [1, 1]} : vector<8x512xf32> to vector<8x496xf32>
    %233 = vector.extract_strided_slice %189 {offsets = [0, 0], sizes = [8, 16], strides = [1, 1]} : vector<8x512xf32> to vector<8x16xf32>
    %234 = tpu.concatenate %232, %233 in 1 : vector<8x496xf32>, vector<8x16xf32> -> vector<8x512xf32>
    %cst_53 = arith.constant 0.000000e+00 : f32
    %235 = vector.shape_cast %8 : vector<1x512xi1> to vector<1x512xi1>
    %236 = vector.broadcast %235 : vector<1x512xi1> to vector<8x512xi1>
    %237 = vector.broadcast %cst_53 : f32 to vector<8x512xf32>
    %238 = arith.select %236, %234, %237 : vector<8x512xi1>, vector<8x512xf32>
    %239 = vector.extract_strided_slice %189 {offsets = [0, 17], sizes = [8, 495], strides = [1, 1]} : vector<8x512xf32> to vector<8x495xf32>
    %240 = vector.extract_strided_slice %189 {offsets = [0, 0], sizes = [8, 17], strides = [1, 1]} : vector<8x512xf32> to vector<8x17xf32>
    %241 = tpu.concatenate %239, %240 in 1 : vector<8x495xf32>, vector<8x17xf32> -> vector<8x512xf32>
    %cst_54 = arith.constant 0.000000e+00 : f32
    %242 = vector.shape_cast %16 : vector<1x512xi1> to vector<1x512xi1>
    %243 = vector.broadcast %242 : vector<1x512xi1> to vector<8x512xi1>
    %244 = vector.broadcast %cst_54 : f32 to vector<8x512xf32>
    %245 = arith.select %243, %241, %244 : vector<8x512xi1>, vector<8x512xf32>
    %246 = tpu.concatenate %196, %203, %210, %217, %189, %224, %231, %238, %245 in 0 : vector<8x512xf32>, vector<8x512xf32>, vector<8x512xf32>, vector<8x512xf32>, vector<8x512xf32>, vector<8x512xf32>, vector<8x512xf32>, vector<8x512xf32>, vector<8x512xf32> -> vector<72x512xf32>
    %cst_55 = arith.constant dense<0.000000e+00> : vector<8x512xf32>
    %247 = tpu.matmul %180, %246, %cst_55 {dimension_numbers = #tpu.dot_dimension_numbers<[1], [0], [0], [1], [0, 0, 1, 1], [], []>} : vector<8x72xf32>, vector<72x512xf32>, vector<8x512xf32> -> vector<8x512xf32>
    %248 = vector.broadcast %181 : vector<8x1xf32> to vector<8x512xf32>
    %249 = arith.addf %247, %248 : vector<8x512xf32>
    %cst_56 = arith.constant 2.000000e-01 : f32
    %250 = vector.broadcast %cst_56 : f32 to vector<8x512xf32>
    %251 = arith.mulf %250, %249 : vector<8x512xf32>
    %252 = arith.maximumf %249, %251 : vector<8x512xf32>
    %cst_57 = arith.constant dense<0.000000e+00> : vector<16x512xf32>
    %253 = tpu.matmul %182, %252, %cst_57 {dimension_numbers = #tpu.dot_dimension_numbers<[1], [0], [0], [1], [0, 0, 1, 1], [], []>} : vector<16x8xf32>, vector<8x512xf32>, vector<16x512xf32> -> vector<16x512xf32>
    %254 = arith.addf %177, %253 : vector<16x512xf32>
    %255 = vector.broadcast %183 : vector<16x1xf32> to vector<16x512xf32>
    %256 = arith.addf %254, %255 : vector<16x512xf32>
    %c0_58 = arith.constant 0 : index
    %c0_59 = arith.constant 0 : index
    %257 = vector.load %arg3[%c0_58, %c0_59] : memref<16x512xf32, #tpu.memory_space<vmem>>, vector<16x512xf32>
    tpu.vector_store %arg3[%c0_58, %c0_59], %256 {strides = array<i32>} : memref<16x512xf32, #tpu.memory_space<vmem>>, vector<16x512xf32>,
    return
  }
  func.func @transform_0(%arg0: i32) -> (i32, i32) {
    %c0_i32 = arith.constant 0 : i32
    %c0_i32_0 = arith.constant 0 : i32
    return %c0_i32, %arg0 : i32, i32
  }
  func.func @transform_1(%arg0: i32) -> (i32, i32) {
    %c0_i32 = arith.constant 0 : i32
    %c0_i32_0 = arith.constant 0 : i32
    %c0_i32_1 = arith.constant 0 : i32
    return %c0_i32, %c0_i32_0 : i32, i32
  }
  func.func @transform_2(%arg0: i32) -> (i32, i32) {
    %c0_i32 = arith.constant 0 : i32
    %c0_i32_0 = arith.constant 0 : i32
    return %c0_i32, %arg0 : i32, i32
  }
}

</mosaic_0001>

<llo_original>
// kernel: _lambda_.1
$region0: #{_lambda_.1}
  #allocation0 [shape = 'u32[]', space=smem, size = 0x4, offset = 0x4, fixed_abs, tag = 'smem constant byte address 0x4 - core index']
  #allocation1 [shape = 'u32[72,128]{1,0:T(1,128)}', space=vmem, size = 0x9000, scoped, tag = 'internal scratch']
  %s0 = inlined_call_operand.vmem [shape: f32[8,512], index: 0, kind: input, shape index: {}]
  %s1 = inlined_call_operand.vmem [shape: f32[224,128], index: 1, kind: input, shape index: {}]
  %s2 = inlined_call_operand.vmem [shape: f32[16,512], index: 2, kind: output, shape index: {}]
  %s3 = sld [smem:[#allocation0]]
  $region18: #{_lambda_.1} parent=0
    _
  %s5 = ssub.s32 1, %s3
  %s6 = scalar_select 0, %s5, %s3
  // Predicated region
  $region2: #{_lambda_.1} parent=0 // pred_check
    _
  $region3: #{_lambda_.1} parent=0 // pred_check_branch
    %8 = sbr.rel (0) target = $region5
  $region4: #{_lambda_.1} parent=0 // pred_region
    _
  $region5: #{_lambda_.1} parent=0 // pred_fallthru
    _
  // Predicated region
  $region6: #{_lambda_.1} parent=0 // pred_check
    _
  $region7: #{_lambda_.1} parent=0 // pred_check_branch
    %10 = sbr.rel (0) target = $region9
  $region8: #{_lambda_.1} parent=0 // pred_region
    _
  $region9: #{_lambda_.1} parent=0 // pred_fallthru
    _
  %v11 = vlaneseq
  %v12 = vand.u32 %v11, 127
  %v13 = vadd.s32 %v12, 128
  %v14 = vadd.s32 %v12, 256
  %v15 = vadd.s32 %v12, 384
  %v16 = vand.u32 %v12, 15
  %v17 = vand.u32 %v13, 15
  %v18 = vand.u32 %v14, 15
  %v19 = vand.u32 %v15, 15
  %v20 = vand.u32 %v12, 255
  %v21 = vand.u32 %v13, 255
  %v22 = vand.u32 %v14, 255
  %v23 = vand.u32 %v15, 255
  %vm24 = vcmp.ge.s32.totalorder %v20, 16
  %vm25 = vcmp.ge.s32.totalorder %v21, 16
  %vm26 = vcmp.ge.s32.totalorder %v22, 16
  %vm27 = vcmp.ge.s32.totalorder %v23, 16
  %vm28 = vcmp.lt.s32.totalorder %v20, 240
  %vm29 = vcmp.lt.s32.totalorder %v21, 240
  %vm30 = vcmp.lt.s32.totalorder %v22, 240
  %vm31 = vcmp.lt.s32.totalorder %v23, 240
  %vm32 = vcmp.ge.s32.totalorder %v16, 1
  %vm33 = vcmp.ge.s32.totalorder %v17, 1
  %vm34 = vcmp.ge.s32.totalorder %v18, 1
  %vm35 = vcmp.ge.s32.totalorder %v19, 1
  %vm36 = vcmp.le.s32.totalorder %v16, 14
  %vm37 = vcmp.le.s32.totalorder %v17, 14
  %vm38 = vcmp.le.s32.totalorder %v18, 14
  %vm39 = vcmp.le.s32.totalorder %v19, 14
  %vm40 = vmand %vm24, %vm32
  %vm41 = vmand %vm25, %vm33
  %vm42 = vmand %vm26, %vm34
  %vm43 = vmand %vm27, %vm35
  %vm44 = vmand %vm24, %vm36
  %vm45 = vmand %vm25, %vm37
  %vm46 = vmand %vm26, %vm38
  %vm47 = vmand %vm27, %vm39
  %vm48 = vmand %vm28, %vm32
  %vm49 = vmand %vm29, %vm33
  %vm50 = vmand %vm30, %vm34
  %vm51 = vmand %vm31, %vm35
  %vm52 = vmand %vm28, %vm36
  %vm53 = vmand %vm29, %vm37
  %vm54 = vmand %vm30, %vm38
  %vm55 = vmand %vm31, %vm39
  %v56 = vld [vmem:[%s0] sm:$0xff]
  %v57 = vld [vmem:[%s0 + $0x8] sm:$0xff]
  %v58 = vld [vmem:[%s0 + $0x10] sm:$0xff]
  %v59 = vld [vmem:[%s0 + $0x18] sm:$0xff]
  %v60 = vld [vmem:[%s1] sm:$0xff]
  %v61 = vld [vmem:[%s1 + $0x8] sm:$0xff]
  %v62 = vld [vmem:[%s1 + $0x10] sm:$0xff]
  %v63 = vld [vmem:[%s1 + $0x18] sm:$0xff]
  %v64 = vld [vmem:[%s1 + $0x20] sm:$0xff]
  %v65 = vld [vmem:[%s1 + $0x28] sm:$0xff]
  %v66 = vld [vmem:[%s1 + $0x30] sm:$0xff]
  %v67 = vld [vmem:[%s1 + $0x38] sm:$0xff]
  %v68 = vld [vmem:[%s1 + $0x40] sm:$0xff]
  %v69 = vld [vmem:[%s1 + $0x48] sm:$0xff]
  %v70 = vld [vmem:[%s1 + $0x50] sm:$0xff]
  %v71 = vld [vmem:[%s1 + $0x58] sm:$0xff]
  %73 = vset.pattern.permute.xlu0 0
  %74 = vperm.xlu0 %73, %v63
  %v75 = vpop.permute.xlu0 %74
  %78 = vset.pattern.permute.xlu0 0
  %79 = vperm.xlu0 %78, %v64
  %v80 = vpop.permute.xlu0 %79
  %83 = vset.pattern.permute.xlu0 0
  %84 = vperm.xlu0 %83, %v65
  %v85 = vpop.permute.xlu0 %84
  %vm87 = vcmask 64512
  %v89 = vsel %vm87, %v60, 0
  %v92 = vsel %vm87, %v61, 0
  %v95 = vsel %vm87, %v62, 0
  %97 = vmatpush.msra.mxu0 0.0
  %98 = vmatpush.msra.mxu0 0.0
  %99 = vmatpush.msra.mxu0 0.0
  %100 = vmatpush.msra.mxu0 0.0
  %101 = vmatpush.msra.mxu0 0.0
  %102 = vmatpush.msra.mxu0 0.0
  %103 = vmatpush.msra.mxu0 0.0
  %104 = vmatpush.msra.mxu0 0.0
  %105 = vmatpush.msra.mxu0 0.0
  %106 = vmatpush.msra.mxu0 0.0
  %107 = vmatpush.msra.mxu0 0.0
  %108 = vmatpush.msra.mxu0 0.0
  %109 = vmatpush.msra.mxu0 0.0
  %110 = vmatpush.msra.mxu0 0.0
  %111 = vmatpush.msra.mxu0 0.0
  %112 = vmatpush.msra.mxu0 %v56
  %113 = vmatmul.f32.gmra.mxu0 %v89
  %v114 = vpop.f32.mrf.mxu0
  %v115 = vadd.f32 %v75, %v114
  %116 = vmatmul.f32.gmra.mxu0 %v92
  %v117 = vpop.f32.mrf.mxu0
  %v118 = vadd.f32 %v80, %v117
  %119 = vmatmul.f32.gmra.mxu0 %v95
  %v120 = vpop.f32.mrf.mxu0
  %v121 = vadd.f32 %v85, %v120
  %122 = vdwg.mxu0
  %123 = vmatpush.msra.mxu0 0.0
  %124 = vmatpush.msra.mxu0 0.0
  %125 = vmatpush.msra.mxu0 0.0
  %126 = vmatpush.msra.mxu0 0.0
  %127 = vmatpush.msra.mxu0 0.0
  %128 = vmatpush.msra.mxu0 0.0
  %129 = vmatpush.msra.mxu0 0.0
  %130 = vmatpush.msra.mxu0 0.0
  %131 = vmatpush.msra.mxu0 0.0
  %132 = vmatpush.msra.mxu0 0.0
  %133 = vmatpush.msra.mxu0 0.0
  %134 = vmatpush.msra.mxu0 0.0
  %135 = vmatpush.msra.mxu0 0.0
  %136 = vmatpush.msra.mxu0 0.0
  %137 = vmatpush.msra.mxu0 0.0
  %138 = vmatpush.msra.mxu0 %v57
  %139 = vmatmul.f32.gmra.mxu0 %v89
  %v140 = vpop.f32.mrf.mxu0
  %v141 = vadd.f32 %v75, %v140
  %142 = vmatmul.f32.gmra.mxu0 %v92
  %v143 = vpop.f32.mrf.mxu0
  %v144 = vadd.f32 %v80, %v143
  %145 = vmatmul.f32.gmra.mxu0 %v95
  %v146 = vpop.f32.mrf.mxu0
  %v147 = vadd.f32 %v85, %v146
  %148 = vdwg.mxu0
  %149 = vmatpush.msra.mxu0 0.0
  %150 = vmatpush.msra.mxu0 0.0
  %151 = vmatpush.msra.mxu0 0.0
  %152 = vmatpush.msra.mxu0 0.0
  %153 = vmatpush.msra.mxu0 0.0
  %154 = vmatpush.msra.mxu0 0.0
  %155 = vmatpush.msra.mxu0 0.0
  %156 = vmatpush.msra.mxu0 0.0
  %157 = vmatpush.msra.mxu0 0.0
  %158 = vmatpush.msra.mxu0 0.0
  %159 = vmatpush.msra.mxu0 0.0
  %160 = vmatpush.msra.mxu0 0.0
  %161 = vmatpush.msra.mxu0 0.0
  %162 = vmatpush.msra.mxu0 0.0
  %163 = vmatpush.msra.mxu0 0.0
  %164 = vmatpush.msra.mxu0 %v58
  %165 = vmatmul.f32.gmra.mxu0 %v89
  %v166 = vpop.f32.mrf.mxu0
  %v167 = vadd.f32 %v75, %v166
  %168 = vmatmul.f32.gmra.mxu0 %v92
  %v169 = vpop.f32.mrf.mxu0
  %v170 = vadd.f32 %v80, %v169
  %171 = vmatmul.f32.gmra.mxu0 %v95
  %v172 = vpop.f32.mrf.mxu0
  %v173 = vadd.f32 %v85, %v172
  %174 = vdwg.mxu0
  %175 = vmatpush.msra.mxu0 0.0
  %176 = vmatpush.msra.mxu0 0.0
  %177 = vmatpush.msra.mxu0 0.0
  %178 = vmatpush.msra.mxu0 0.0
  %179 = vmatpush.msra.mxu0 0.0
  %180 = vmatpush.msra.mxu0 0.0
  %181 = vmatpush.msra.mxu0 0.0
  %182 = vmatpush.msra.mxu0 0.0
  %183 = vmatpush.msra.mxu0 0.0
  %184 = vmatpush.msra.mxu0 0.0
  %185 = vmatpush.msra.mxu0 0.0
  %186 = vmatpush.msra.mxu0 0.0
  %187 = vmatpush.msra.mxu0 0.0
  %188 = vmatpush.msra.mxu0 0.0
  %189 = vmatpush.msra.mxu0 0.0
  %190 = vmatpush.msra.mxu0 %v59
  %191 = vmatmul.f32.gmra.mxu0 %v89
  %v192 = vpop.f32.mrf.mxu0
  %v193 = vadd.f32 %v75, %v192
  %194 = vmatmul.f32.gmra.mxu0 %v92
  %v195 = vpop.f32.mrf.mxu0
  %v196 = vadd.f32 %v80, %v195
  %197 = vmatmul.f32.gmra.mxu0 %v95
  %v198 = vpop.f32.mrf.mxu0
  %v199 = vadd.f32 %v85, %v198
  %200 = vdwg.mxu0
  %v201 = vmul.f32 %v115, 0.2
  %v202 = vmul.f32 %v141, 0.2
  %v203 = vmul.f32 %v167, 0.2
  %v204 = vmul.f32 %v193, 0.2
  %v205 = vmax.f32 %v115, %v201
  %v206 = vmax.f32 %v141, %v202
  %v207 = vmax.f32 %v167, %v203
  %v208 = vmax.f32 %v193, %v204
  %210 = vrot.lane.b32.xlu0 %v208, 17
  %v211 = vpop.permute.xlu0 %210
  %216 = vrot.lane.b32.xlu0 %v205, 17
  %v217 = vpop.permute.xlu0 %216
  %218 = vrot.lane.b32.xlu0 %v206, 17
  %v219 = vpop.permute.xlu0 %218
  %220 = vrot.lane.b32.xlu0 %v207, 17
  %v221 = vpop.permute.xlu0 %220
  %vm222 = vcmask 138240
  %v223 = vsel %vm222, %v217, %v219
  %v224 = vsel %vm222, %v219, %v221
  %v225 = vsel %vm222, %v221, %v211
  %v230 = vsel %vm222, %v211, %v217
  %v231 = vsel %vm40, 1, 0
  %v232 = vsel %vm41, 1, 0
  %v233 = vsel %vm42, 1, 0
  %v234 = vsel %vm43, 1, 0
  %vm235 = vcmp.eq.s32.totalorder %v231, 1
  %vm236 = vcmp.eq.s32.totalorder %v232, 1
  %vm237 = vcmp.eq.s32.totalorder %v233, 1
  %vm238 = vcmp.eq.s32.totalorder %v234, 1
  %v239 = vsel %vm235, %v230, 0.0
  %v240 = vsel %vm236, %v223, 0.0
  %v241 = vsel %vm237, %v224, 0.0
  %v242 = vsel %vm238, %v225, 0.0
  %243 = vrot.lane.b32.xlu0 %v208, 16
  %v244 = vpop.permute.xlu0 %243
  %246 = vrot.lane.b32.xlu0 %v205, 16
  %v247 = vpop.permute.xlu0 %246
  %248 = vrot.lane.b32.xlu0 %v206, 16
  %v249 = vpop.permute.xlu0 %248
  %250 = vrot.lane.b32.xlu0 %v207, 16
  %v251 = vpop.permute.xlu0 %250
  %vm252 = vcmask 130048
  %v253 = vsel %vm252, %v247, %v249
  %v254 = vsel %vm252, %v249, %v251
  %v255 = vsel %vm252, %v251, %v244
  %v260 = vsel %vm252, %v244, %v247
  %v261 = vsel %vm24, 1, 0
  %v262 = vsel %vm25, 1, 0
  %v263 = vsel %vm26, 1, 0
  %v264 = vsel %vm27, 1, 0
  %vm265 = vcmp.eq.s32.totalorder %v261, 1
  %vm266 = vcmp.eq.s32.totalorder %v262, 1
  %vm267 = vcmp.eq.s32.totalorder %v263, 1
  %vm268 = vcmp.eq.s32.totalorder %v264, 1
  %v269 = vsel %vm265, %v260, 0.0
  %v270 = vsel %vm266, %v253, 0.0
  %v271 = vsel %vm267, %v254, 0.0
  %v272 = vsel %vm268, %v255, 0.0
  %273 = vrot.lane.b32.xlu0 %v208, 15
  %v274 = vpop.permute.xlu0 %273
  %276 = vrot.lane.b32.xlu0 %v205, 15
  %v277 = vpop.permute.xlu0 %276
  %278 = vrot.lane.b32.xlu0 %v206, 15
  %v279 = vpop.permute.xlu0 %278
  %280 = vrot.lane.b32.xlu0 %v207, 15
  %v281 = vpop.permute.xlu0 %280
  %vm282 = vcmask 121856
  %v283 = vsel %vm282, %v277, %v279
  %v284 = vsel %vm282, %v279, %v281
  %v285 = vsel %vm282, %v281, %v274
  %v290 = vsel %vm282, %v274, %v277
  %v291 = vsel %vm44, 1, 0
  %v292 = vsel %vm45, 1, 0
  %v293 = vsel %vm46, 1, 0
  %v294 = vsel %vm47, 1, 0
  %vm295 = vcmp.eq.s32.totalorder %v291, 1
  %vm296 = vcmp.eq.s32.totalorder %v292, 1
  %vm297 = vcmp.eq.s32.totalorder %v293, 1
  %vm298 = vcmp.eq.s32.totalorder %v294, 1
  %v299 = vsel %vm295, %v290, 0.0
  %v300 = vsel %vm296, %v283, 0.0
  %v301 = vsel %vm297, %v284, 0.0
  %v302 = vsel %vm298, %v285, 0.0
  %303 = vrot.lane.b32.xlu0 %v208, 1
  %v304 = vpop.permute.xlu0 %303
  %306 = vrot.lane.b32.xlu0 %v205, 1
  %v307 = vpop.permute.xlu0 %306
  %308 = vrot.lane.b32.xlu0 %v206, 1
  %v309 = vpop.permute.xlu0 %308
  %310 = vrot.lane.b32.xlu0 %v207, 1
  %v311 = vpop.permute.xlu0 %310
  %vm312 = vcmask 7168
  %v313 = vsel %vm312, %v307, %v309
  %v314 = vsel %vm312, %v309, %v311
  %v315 = vsel %vm312, %v311, %v304
  %v320 = vsel %vm312, %v304, %v307
  %v321 = vsel %vm32, 1, 0
  %v322 = vsel %vm33, 1, 0
  %v323 = vsel %vm34, 1, 0
  %v324 = vsel %vm35, 1, 0
  %vm325 = vcmp.eq.s32.totalorder %v321, 1
  %vm326 = vcmp.eq.s32.totalorder %v322, 1
  %vm327 = vcmp.eq.s32.totalorder %v323, 1
  %vm328 = vcmp.eq.s32.totalorder %v324, 1
  %v329 = vsel %vm325, %v320, 0.0
  %v330 = vsel %vm326, %v313, 0.0
  %v331 = vsel %vm327, %v314, 0.0
  %v332 = vsel %vm328, %v315, 0.0
  %333 = vrot.lane.b32.xlu0 %v205, 127
  %v334 = vpop.permute.xlu0 %333
  %335 = vrot.lane.b32.xlu0 %v206, 127
  %v336 = vpop.permute.xlu0 %335
  %337 = vrot.lane.b32.xlu0 %v207, 127
  %v338 = vpop.permute.xlu0 %337
  %339 = vrot.lane.b32.xlu0 %v208, 127
  %v340 = vpop.permute.xlu0 %339
  %vm341 = vcmask 1039360
  %v342 = vsel %vm341, %v334, %v336
  %v343 = vsel %vm341, %v336, %v338
  %v344 = vsel %vm341, %v338, %v340
  %v350 = vsel %vm341, %v340, %v334
  %v351 = vsel %vm36, 1, 0
  %v352 = vsel %vm37, 1, 0
  %v353 = vsel %vm38, 1, 0
  %v354 = vsel %vm39, 1, 0
  %vm355 = vcmp.eq.s32.totalorder %v351, 1
  %vm356 = vcmp.eq.s32.totalorder %v352, 1
  %vm357 = vcmp.eq.s32.totalorder %v353, 1
  %vm358 = vcmp.eq.s32.totalorder %v354, 1
  %v359 = vsel %vm355, %v342, 0.0
  %v360 = vsel %vm356, %v343, 0.0
  %v361 = vsel %vm357, %v344, 0.0
  %v362 = vsel %vm358, %v350, 0.0
  %363 = vrot.lane.b32.xlu0 %v205, 113
  %v364 = vpop.permute.xlu0 %363
  %365 = vrot.lane.b32.xlu0 %v206, 113
  %v366 = vpop.permute.xlu0 %365
  %367 = vrot.lane.b32.xlu0 %v207, 113
  %v368 = vpop.permute.xlu0 %367
  %369 = vrot.lane.b32.xlu0 %v208, 113
  %v370 = vpop.permute.xlu0 %369
  %vm371 = vcmask 924672
  %v372 = vsel %vm371, %v364, %v366
  %v373 = vsel %vm371, %v366, %v368
  %v374 = vsel %vm371, %v368, %v370
  %v380 = vsel %vm371, %v370, %v364
  %v381 = vsel %vm48, 1, 0
  %v382 = vsel %vm49, 1, 0
  %v383 = vsel %vm50, 1, 0
  %v384 = vsel %vm51, 1, 0
  %vm385 = vcmp.eq.s32.totalorder %v381, 1
  %vm386 = vcmp.eq.s32.totalorder %v382, 1
  %vm387 = vcmp.eq.s32.totalorder %v383, 1
  %vm388 = vcmp.eq.s32.totalorder %v384, 1
  %v389 = vsel %vm385, %v372, 0.0
  %v390 = vsel %vm386, %v373, 0.0
  %v391 = vsel %vm387, %v374, 0.0
  %v392 = vsel %vm388, %v380, 0.0
  %393 = vrot.lane.b32.xlu0 %v205, 112
  %v394 = vpop.permute.xlu0 %393
  %395 = vrot.lane.b32.xlu0 %v206, 112
  %v396 = vpop.permute.xlu0 %395
  %397 = vrot.lane.b32.xlu0 %v207, 112
  %v398 = vpop.permute.xlu0 %397
  %399 = vrot.lane.b32.xlu0 %v208, 112
  %v400 = vpop.permute.xlu0 %399
  %vm401 = vcmask 916480
  %v402 = vsel %vm401, %v394, %v396
  %v403 = vsel %vm401, %v396, %v398
  %v404 = vsel %vm401, %v398, %v400
  %v410 = vsel %vm401, %v400, %v394
  %v411 = vsel %vm28, 1, 0
  %v412 = vsel %vm29, 1, 0
  %v413 = vsel %vm30, 1, 0
  %v414 = vsel %vm31, 1, 0
  %vm415 = vcmp.eq.s32.totalorder %v411, 1
  %vm416 = vcmp.eq.s32.totalorder %v412, 1
  %vm417 = vcmp.eq.s32.totalorder %v413, 1
  %vm418 = vcmp.eq.s32.totalorder %v414, 1
  %v419 = vsel %vm415, %v402, 0.0
  %v420 = vsel %vm416, %v403, 0.0
  %v421 = vsel %vm417, %v404, 0.0
  %v422 = vsel %vm418, %v410, 0.0
  %423 = vrot.lane.b32.xlu0 %v205, 111
  %v424 = vpop.permute.xlu0 %423
  %425 = vrot.lane.b32.xlu0 %v206, 111
  %v426 = vpop.permute.xlu0 %425
  %427 = vrot.lane.b32.xlu0 %v207, 111
  %v428 = vpop.permute.xlu0 %427
  %429 = vrot.lane.b32.xlu0 %v208, 111
  %v430 = vpop.permute.xlu0 %429
  %vm431 = vcmask 908288
  %v432 = vsel %vm431, %v424, %v426
  %v433 = vsel %vm431, %v426, %v428
  %v434 = vsel %vm431, %v428, %v430
  %v440 = vsel %vm431, %v430, %v424
  %v441 = vsel %vm52, 1, 0
  %v442 = vsel %vm53, 1, 0
  %v443 = vsel %vm54, 1, 0
  %v444 = vsel %vm55, 1, 0
  %vm445 = vcmp.eq.s32.totalorder %v441, 1
  %vm446 = vcmp.eq.s32.totalorder %v442, 1
  %vm447 = vcmp.eq.s32.totalorder %v443, 1
  %vm448 = vcmp.eq.s32.totalorder %v444, 1
  %v449 = vsel %vm445, %v432, 0.0
  %v450 = vsel %vm446, %v433, 0.0
  %v451 = vsel %vm447, %v434, 0.0
  %v452 = vsel %vm448, %v440, 0.0
  %454 = vset.pattern.permute.xlu0 0
  %455 = vperm.xlu0 %454, %v67
  %v456 = vpop.permute.xlu0 %455
  %vm458 = vcmask 588800
  %v460 = vsel %vm458, %v66, 0
  %462 = vmatpush.msra.mxu0 0.0
  %463 = vmatpush.msra.mxu0 0.0
  %464 = vmatpush.msra.mxu0 0.0
  %465 = vmatpush.msra.mxu0 0.0
  %466 = vmatpush.msra.mxu0 0.0
  %467 = vmatpush.msra.mxu0 0.0
  %468 = vmatpush.msra.mxu0 0.0
  %469 = vmatpush.msra.mxu0 %v449
  %470 = vmatpush.msra.mxu0 %v419
  %471 = vmatpush.msra.mxu0 %v389
  %472 = vmatpush.msra.mxu0 %v359
  %473 = vmatpush.msra.mxu0 %v205
  %474 = vmatpush.msra.mxu0 %v329
  %475 = vmatpush.msra.mxu0 %v299
  %476 = vmatpush.msra.mxu0 %v269
  %477 = vmatpush.msra.mxu0 %v239
  %478 = vmatmul.f32.gmra.mxu0 %v460
  %v479 = vpop.f32.mrf.mxu0
  %v480 = vadd.f32 %v456, %v479
  %481 = vdwg.mxu0
  %482 = vmatpush.msra.mxu0 0.0
  %483 = vmatpush.msra.mxu0 0.0
  %484 = vmatpush.msra.mxu0 0.0
  %485 = vmatpush.msra.mxu0 0.0
  %486 = vmatpush.msra.mxu0 0.0
  %487 = vmatpush.msra.mxu0 0.0
  %488 = vmatpush.msra.mxu0 0.0
  %489 = vmatpush.msra.mxu0 %v450
  %490 = vmatpush.msra.mxu0 %v420
  %491 = vmatpush.msra.mxu0 %v390
  %492 = vmatpush.msra.mxu0 %v360
  %493 = vmatpush.msra.mxu0 %v206
  %494 = vmatpush.msra.mxu0 %v330
  %495 = vmatpush.msra.mxu0 %v300
  %496 = vmatpush.msra.mxu0 %v270
  %497 = vmatpush.msra.mxu0 %v240
  %498 = vmatmul.f32.gmra.mxu0 %v460
  %v499 = vpop.f32.mrf.mxu0
  %v500 = vadd.f32 %v456, %v499
  %501 = vdwg.mxu0
  %502 = vmatpush.msra.mxu0 0.0
  %503 = vmatpush.msra.mxu0 0.0
  %504 = vmatpush.msra.mxu0 0.0
  %505 = vmatpush.msra.mxu0 0.0
  %506 = vmatpush.msra.mxu0 0.0
  %507 = vmatpush.msra.mxu0 0.0
  %508 = vmatpush.msra.mxu0 0.0
  %509 = vmatpush.msra.mxu0 %v451
  %510 = vmatpush.msra.mxu0 %v421
  %511 = vmatpush.msra.mxu0 %v391
  %512 = vmatpush.msra.mxu0 %v361
  %513 = vmatpush.msra.mxu0 %v207
  %514 = vmatpush.msra.mxu0 %v331
  %515 = vmatpush.msra.mxu0 %v301
  %516 = vmatpush.msra.mxu0 %v271
  %517 = vmatpush.msra.mxu0 %v241
  %518 = vmatmul.f32.gmra.mxu0 %v460
  %v519 = vpop.f32.mrf.mxu0
  %v520 = vadd.f32 %v456, %v519
  %521 = vdwg.mxu0
  %522 = vmatpush.msra.mxu0 0.0
  %523 = vmatpush.msra.mxu0 0.0
  %524 = vmatpush.msra.mxu0 0.0
  %525 = vmatpush.msra.mxu0 0.0
  %526 = vmatpush.msra.mxu0 0.0
  %527 = vmatpush.msra.mxu0 0.0
  %528 = vmatpush.msra.mxu0 0.0
  %529 = vmatpush.msra.mxu0 %v452
  %530 = vmatpush.msra.mxu0 %v422
  %531 = vmatpush.msra.mxu0 %v392
  %532 = vmatpush.msra.mxu0 %v362
  %533 = vmatpush.msra.mxu0 %v208
  %534 = vmatpush.msra.mxu0 %v332
  %535 = vmatpush.msra.mxu0 %v302
  %536 = vmatpush.msra.mxu0 %v272
  %537 = vmatpush.msra.mxu0 %v242
  %538 = vmatmul.f32.gmra.mxu0 %v460
  %v539 = vpop.f32.mrf.mxu0
  %v540 = vadd.f32 %v456, %v539
  %541 = vdwg.mxu0
  %v542 = vmul.f32 %v480, 0.2
  %v543 = vmul.f32 %v500, 0.2
  %v544 = vmul.f32 %v520, 0.2
  %v545 = vmul.f32 %v540, 0.2
  %v546 = vmax.f32 %v480, %v542
  %v547 = vmax.f32 %v500, %v543
  %v548 = vmax.f32 %v520, %v544
  %v549 = vmax.f32 %v540, %v545
  %v551 = vsel %vm87, %v68, 0
  %v554 = vsel %vm87, %v69, 0
  %556 = vmatpush.msra.mxu0 0.0
  %557 = vmatpush.msra.mxu0 0.0
  %558 = vmatpush.msra.mxu0 0.0
  %559 = vmatpush.msra.mxu0 0.0
  %560 = vmatpush.msra.mxu0 0.0
  %561 = vmatpush.msra.mxu0 0.0
  %562 = vmatpush.msra.mxu0 0.0
  %563 = vmatpush.msra.mxu0 0.0
  %564 = vmatpush.msra.mxu0 0.0
  %565 = vmatpush.msra.mxu0 0.0
  %566 = vmatpush.msra.mxu0 0.0
  %567 = vmatpush.msra.mxu0 0.0
  %568 = vmatpush.msra.mxu0 0.0
  %569 = vmatpush.msra.mxu0 0.0
  %570 = vmatpush.msra.mxu0 0.0
  %571 = vmatpush.msra.mxu0 %v546
  %572 = vmatmul.f32.gmra.mxu0 %v551
  %v573 = vpop.f32.mrf.mxu0
  %v574 = vadd.f32 0.0, %v573
  %575 = vmatmul.f32.gmra.mxu0 %v554
  %v576 = vpop.f32.mrf.mxu0
  %v577 = vadd.f32 0.0, %v576
  %578 = vdwg.mxu0
  %579 = vmatpush.msra.mxu0 0.0
  %580 = vmatpush.msra.mxu0 0.0
  %581 = vmatpush.msra.mxu0 0.0
  %582 = vmatpush.msra.mxu0 0.0
  %583 = vmatpush.msra.mxu0 0.0
  %584 = vmatpush.msra.mxu0 0.0
  %585 = vmatpush.msra.mxu0 0.0
  %586 = vmatpush.msra.mxu0 0.0
  %587 = vmatpush.msra.mxu0 0.0
  %588 = vmatpush.msra.mxu0 0.0
  %589 = vmatpush.msra.mxu0 0.0
  %590 = vmatpush.msra.mxu0 0.0
  %591 = vmatpush.msra.mxu0 0.0
  %592 = vmatpush.msra.mxu0 0.0
  %593 = vmatpush.msra.mxu0 0.0
  %594 = vmatpush.msra.mxu0 %v547
  %595 = vmatmul.f32.gmra.mxu0 %v551
  %v596 = vpop.f32.mrf.mxu0
  %v597 = vadd.f32 0.0, %v596
  %598 = vmatmul.f32.gmra.mxu0 %v554
  %v599 = vpop.f32.mrf.mxu0
  %v600 = vadd.f32 0.0, %v599
  %601 = vdwg.mxu0
  %602 = vmatpush.msra.mxu0 0.0
  %603 = vmatpush.msra.mxu0 0.0
  %604 = vmatpush.msra.mxu0 0.0
  %605 = vmatpush.msra.mxu0 0.0
  %606 = vmatpush.msra.mxu0 0.0
  %607 = vmatpush.msra.mxu0 0.0
  %608 = vmatpush.msra.mxu0 0.0
  %609 = vmatpush.msra.mxu0 0.0
  %610 = vmatpush.msra.mxu0 0.0
  %611 = vmatpush.msra.mxu0 0.0
  %612 = vmatpush.msra.mxu0 0.0
  %613 = vmatpush.msra.mxu0 0.0
  %614 = vmatpush.msra.mxu0 0.0
  %615 = vmatpush.msra.mxu0 0.0
  %616 = vmatpush.msra.mxu0 0.0
  %617 = vmatpush.msra.mxu0 %v548
  %618 = vmatmul.f32.gmra.mxu0 %v551
  %v619 = vpop.f32.mrf.mxu0
  %v620 = vadd.f32 0.0, %v619
  %621 = vmatmul.f32.gmra.mxu0 %v554
  %v622 = vpop.f32.mrf.mxu0
  %v623 = vadd.f32 0.0, %v622
  %624 = vdwg.mxu0
  %625 = vmatpush.msra.mxu0 0.0
  %626 = vmatpush.msra.mxu0 0.0
  %627 = vmatpush.msra.mxu0 0.0
  %628 = vmatpush.msra.mxu0 0.0
  %629 = vmatpush.msra.mxu0 0.0
  %630 = vmatpush.msra.mxu0 0.0
  %631 = vmatpush.msra.mxu0 0.0
  %632 = vmatpush.msra.mxu0 0.0
  %633 = vmatpush.msra.mxu0 0.0
  %634 = vmatpush.msra.mxu0 0.0
  %635 = vmatpush.msra.mxu0 0.0
  %636 = vmatpush.msra.mxu0 0.0
  %637 = vmatpush.msra.mxu0 0.0
  %638 = vmatpush.msra.mxu0 0.0
  %639 = vmatpush.msra.mxu0 0.0
  %640 = vmatpush.msra.mxu0 %v549
  %641 = vmatmul.f32.gmra.mxu0 %v551
  %v642 = vpop.f32.mrf.mxu0
  %v643 = vadd.f32 0.0, %v642
  %644 = vmatmul.f32.gmra.mxu0 %v554
  %v645 = vpop.f32.mrf.mxu0
  %v646 = vadd.f32 0.0, %v645
  %647 = vdwg.mxu0
  %v648 = vadd.f32 %v118, %v574
  %v649 = vadd.f32 %v144, %v597
  %v650 = vadd.f32 %v170, %v620
  %v651 = vadd.f32 %v196, %v643
  %v652 = vadd.f32 %v121, %v577
  %v653 = vadd.f32 %v147, %v600
  %v654 = vadd.f32 %v173, %v623
  %v655 = vadd.f32 %v199, %v646
  %657 = vset.pattern.permute.xlu0 0
  %658 = vperm.xlu0 %657, %v70
  %v659 = vpop.permute.xlu0 %658
  %662 = vset.pattern.permute.xlu0 0
  %663 = vperm.xlu0 %662, %v71
  %v664 = vpop.permute.xlu0 %663
  %v666 = vadd.f32 %v648, %v659
  %v667 = vadd.f32 %v649, %v659
  %v668 = vadd.f32 %v650, %v659
  %v669 = vadd.f32 %v651, %v659
  %v670 = vadd.f32 %v652, %v664
  %v671 = vadd.f32 %v653, %v664
  %v672 = vadd.f32 %v654, %v664
  %v673 = vadd.f32 %v655, %v664
  %v674 = vld [vmem:[%s1 + $0x60] sm:$0xff]
  %v675 = vld [vmem:[%s1 + $0x68] sm:$0xff]
  %v676 = vld [vmem:[%s1 + $0x70] sm:$0xff]
  %v677 = vld [vmem:[%s1 + $0x78] sm:$0xff]
  %v678 = vld [vmem:[%s1 + $0x80] sm:$0xff]
  %v679 = vld [vmem:[%s1 + $0x88] sm:$0xff]
  %v680 = vld [vmem:[%s1 + $0x90] sm:$0xff]
  %v681 = vld [vmem:[%s1 + $0x98] sm:$0xff]
  %683 = vset.pattern.permute.xlu0 0
  %684 = vperm.xlu0 %683, %v675
  %v685 = vpop.permute.xlu0 %684
  %v688 = vsel %vm252, %v674, 0
  %690 = vmatpush.msra.mxu0 0.0
  %691 = vmatpush.msra.mxu0 0.0
  %692 = vmatpush.msra.mxu0 0.0
  %693 = vmatpush.msra.mxu0 0.0
  %694 = vmatpush.msra.mxu0 0.0
  %695 = vmatpush.msra.mxu0 0.0
  %696 = vmatpush.msra.mxu0 0.0
  %697 = vmatpush.msra.mxu0 0.0
  %698 = vmatpush.msra.mxu0 0.0
  %699 = vmatpush.msra.mxu0 0.0
  %700 = vmatpush.msra.mxu0 0.0
  %701 = vmatpush.msra.mxu0 0.0
  %702 = vmatpush.msra.mxu0 0.0
  %703 = vmatpush.msra.mxu0 0.0
  %704 = vmatpush.msra.mxu0 %v670
  %705 = vmatpush.msra.mxu0 %v666
  %706 = vmatmul.f32.gmra.mxu0 %v688
  %v707 = vpop.f32.mrf.mxu0
  %v708 = vadd.f32 %v685, %v707
  %709 = vdwg.mxu0
  %710 = vmatpush.msra.mxu0 0.0
  %711 = vmatpush.msra.mxu0 0.0
  %712 = vmatpush.msra.mxu0 0.0
  %713 = vmatpush.msra.mxu0 0.0
  %714 = vmatpush.msra.mxu0 0.0
  %715 = vmatpush.msra.mxu0 0.0
  %716 = vmatpush.msra.mxu0 0.0
  %717 = vmatpush.msra.mxu0 0.0
  %718 = vmatpush.msra.mxu0 0.0
  %719 = vmatpush.msra.mxu0 0.0
  %720 = vmatpush.msra.mxu0 0.0
  %721 = vmatpush.msra.mxu0 0.0
  %722 = vmatpush.msra.mxu0 0.0
  %723 = vmatpush.msra.mxu0 0.0
  %724 = vmatpush.msra.mxu0 %v671
  %725 = vmatpush.msra.mxu0 %v667
  %726 = vmatmul.f32.gmra.mxu0 %v688
  %v727 = vpop.f32.mrf.mxu0
  %v728 = vadd.f32 %v685, %v727
  %729 = vdwg.mxu0
  %730 = vmatpush.msra.mxu0 0.0
  %731 = vmatpush.msra.mxu0 0.0
  %732 = vmatpush.msra.mxu0 0.0
  %733 = vmatpush.msra.mxu0 0.0
  %734 = vmatpush.msra.mxu0 0.0
  %735 = vmatpush.msra.mxu0 0.0
  %736 = vmatpush.msra.mxu0 0.0
  %737 = vmatpush.msra.mxu0 0.0
  %738 = vmatpush.msra.mxu0 0.0
  %739 = vmatpush.msra.mxu0 0.0
  %740 = vmatpush.msra.mxu0 0.0
  %741 = vmatpush.msra.mxu0 0.0
  %742 = vmatpush.msra.mxu0 0.0
  %743 = vmatpush.msra.mxu0 0.0
  %744 = vmatpush.msra.mxu0 %v672
  %745 = vmatpush.msra.mxu0 %v668
  %746 = vmatmul.f32.gmra.mxu0 %v688
  %v747 = vpop.f32.mrf.mxu0
  %v748 = vadd.f32 %v685, %v747
  %749 = vdwg.mxu0
  %750 = vmatpush.msra.mxu0 0.0
  %751 = vmatpush.msra.mxu0 0.0
  %752 = vmatpush.msra.mxu0 0.0
  %753 = vmatpush.msra.mxu0 0.0
  %754 = vmatpush.msra.mxu0 0.0
  %755 = vmatpush.msra.mxu0 0.0
  %756 = vmatpush.msra.mxu0 0.0
  %757 = vmatpush.msra.mxu0 0.0
  %758 = vmatpush.msra.mxu0 0.0
  %759 = vmatpush.msra.mxu0 0.0
  %760 = vmatpush.msra.mxu0 0.0
  %761 = vmatpush.msra.mxu0 0.0
  %762 = vmatpush.msra.mxu0 0.0
  %763 = vmatpush.msra.mxu0 0.0
  %764 = vmatpush.msra.mxu0 %v673
  %765 = vmatpush.msra.mxu0 %v669
  %766 = vmatmul.f32.gmra.mxu0 %v688
  %v767 = vpop.f32.mrf.mxu0
  %v768 = vadd.f32 %v685, %v767
  %769 = vdwg.mxu0
  %v770 = vmul.f32 %v708, 0.2
  %v771 = vmul.f32 %v728, 0.2
  %v772 = vmul.f32 %v748, 0.2
  %v773 = vmul.f32 %v768, 0.2
  %v774 = vmax.f32 %v708, %v770
  %v775 = vmax.f32 %v728, %v771
  %v776 = vmax.f32 %v748, %v772
  %v777 = vmax.f32 %v768, %v773
  %779 = vrot.lane.b32.xlu0 %v777, 17
  %v780 = vpop.permute.xlu0 %779
  %785 = vrot.lane.b32.xlu0 %v774, 17
  %v786 = vpop.permute.xlu0 %785
  %787 = vrot.lane.b32.xlu0 %v775, 17
  %v788 = vpop.permute.xlu0 %787
  %789 = vrot.lane.b32.xlu0 %v776, 17
  %v790 = vpop.permute.xlu0 %789
  %v791 = vsel %vm222, %v786, %v788
  %v792 = vsel %vm222, %v788, %v790
  %v793 = vsel %vm222, %v790, %v780
  %v798 = vsel %vm222, %v780, %v786
  %v799 = vsel %vm235, %v798, 0.0
  %v800 = vsel %vm236, %v791, 0.0
  %v801 = vsel %vm237, %v792, 0.0
  %v802 = vsel %vm238, %v793, 0.0
  %803 = vrot.lane.b32.xlu0 %v777, 16
  %v804 = vpop.permute.xlu0 %803
  %806 = vrot.lane.b32.xlu0 %v774, 16
  %v807 = vpop.permute.xlu0 %806
  %808 = vrot.lane.b32.xlu0 %v775, 16
  %v809 = vpop.permute.xlu0 %808
  %810 = vrot.lane.b32.xlu0 %v776, 16
  %v811 = vpop.permute.xlu0 %810
  %v812 = vsel %vm252, %v807, %v809
  %v813 = vsel %vm252, %v809, %v811
  %v814 = vsel %vm252, %v811, %v804
  %v819 = vsel %vm252, %v804, %v807
  %v820 = vsel %vm265, %v819, 0.0
  %v821 = vsel %vm266, %v812, 0.0
  %v822 = vsel %vm267, %v813, 0.0
  %v823 = vsel %vm268, %v814, 0.0
  %824 = vrot.lane.b32.xlu0 %v777, 15
  %v825 = vpop.permute.xlu0 %824
  %827 = vrot.lane.b32.xlu0 %v774, 15
  %v828 = vpop.permute.xlu0 %827
  %829 = vrot.lane.b32.xlu0 %v775, 15
  %v830 = vpop.permute.xlu0 %829
  %831 = vrot.lane.b32.xlu0 %v776, 15
  %v832 = vpop.permute.xlu0 %831
  %v833 = vsel %vm282, %v828, %v830
  %v834 = vsel %vm282, %v830, %v832
  %v835 = vsel %vm282, %v832, %v825
  %v840 = vsel %vm282, %v825, %v828
  %v841 = vsel %vm295, %v840, 0.0
  %v842 = vsel %vm296, %v833, 0.0
  %v843 = vsel %vm297, %v834, 0.0
  %v844 = vsel %vm298, %v835, 0.0
  %845 = vrot.lane.b32.xlu0 %v777, 1
  %v846 = vpop.permute.xlu0 %845
  %848 = vrot.lane.b32.xlu0 %v774, 1
  %v849 = vpop.permute.xlu0 %848
  %850 = vrot.lane.b32.xlu0 %v775, 1
  %v851 = vpop.permute.xlu0 %850
  %852 = vrot.lane.b32.xlu0 %v776, 1
  %v853 = vpop.permute.xlu0 %852
  %v854 = vsel %vm312, %v849, %v851
  %v855 = vsel %vm312, %v851, %v853
  %v856 = vsel %vm312, %v853, %v846
  %v861 = vsel %vm312, %v846, %v849
  %v862 = vsel %vm325, %v861, 0.0
  %v863 = vsel %vm326, %v854, 0.0
  %v864 = vsel %vm327, %v855, 0.0
  %v865 = vsel %vm328, %v856, 0.0
  %866 = vrot.lane.b32.xlu0 %v774, 127
  %v867 = vpop.permute.xlu0 %866
  %868 = vrot.lane.b32.xlu0 %v775, 127
  %v869 = vpop.permute.xlu0 %868
  %870 = vrot.lane.b32.xlu0 %v776, 127
  %v871 = vpop.permute.xlu0 %870
  %872 = vrot.lane.b32.xlu0 %v777, 127
  %v873 = vpop.permute.xlu0 %872
  %v874 = vsel %vm341, %v867, %v869
  %v875 = vsel %vm341, %v869, %v871
  %v876 = vsel %vm341, %v871, %v873
  %v882 = vsel %vm341, %v873, %v867
  %v883 = vsel %vm355, %v874, 0.0
  %v884 = vsel %vm356, %v875, 0.0
  %v885 = vsel %vm357, %v876, 0.0
  %v886 = vsel %vm358, %v882, 0.0
  %887 = vrot.lane.b32.xlu0 %v774, 113
  %v888 = vpop.permute.xlu0 %887
  %889 = vrot.lane.b32.xlu0 %v775, 113
  %v890 = vpop.permute.xlu0 %889
  %891 = vrot.lane.b32.xlu0 %v776, 113
  %v892 = vpop.permute.xlu0 %891
  %893 = vrot.lane.b32.xlu0 %v777, 113
  %v894 = vpop.permute.xlu0 %893
  %v895 = vsel %vm371, %v888, %v890
  %v896 = vsel %vm371, %v890, %v892
  %v897 = vsel %vm371, %v892, %v894
  %v903 = vsel %vm371, %v894, %v888
  %v904 = vsel %vm385, %v895, 0.0
  %v905 = vsel %vm386, %v896, 0.0
  %v906 = vsel %vm387, %v897, 0.0
  %v907 = vsel %vm388, %v903, 0.0
  %908 = vrot.lane.b32.xlu0 %v774, 112
  %v909 = vpop.permute.xlu0 %908
  %910 = vrot.lane.b32.xlu0 %v775, 112
  %v911 = vpop.permute.xlu0 %910
  %912 = vrot.lane.b32.xlu0 %v776, 112
  %v913 = vpop.permute.xlu0 %912
  %914 = vrot.lane.b32.xlu0 %v777, 112
  %v915 = vpop.permute.xlu0 %914
  %v916 = vsel %vm401, %v909, %v911
  %v917 = vsel %vm401, %v911, %v913
  %v918 = vsel %vm401, %v913, %v915
  %v924 = vsel %vm401, %v915, %v909
  %v925 = vsel %vm415, %v916, 0.0
  %v926 = vsel %vm416, %v917, 0.0
  %v927 = vsel %vm417, %v918, 0.0
  %v928 = vsel %vm418, %v924, 0.0
  %929 = vrot.lane.b32.xlu0 %v774, 111
  %v930 = vpop.permute.xlu0 %929
  %931 = vrot.lane.b32.xlu0 %v775, 111
  %v932 = vpop.permute.xlu0 %931
  %933 = vrot.lane.b32.xlu0 %v776, 111
  %v934 = vpop.permute.xlu0 %933
  %935 = vrot.lane.b32.xlu0 %v777, 111
  %v936 = vpop.permute.xlu0 %935
  %v937 = vsel %vm431, %v930, %v932
  %v938 = vsel %vm431, %v932, %v934
  %v939 = vsel %vm431, %v934, %v936
  %v945 = vsel %vm431, %v936, %v930
  %v946 = vsel %vm445, %v937, 0.0
  %v947 = vsel %vm446, %v938, 0.0
  %v948 = vsel %vm447, %v939, 0.0
  %v949 = vsel %vm448, %v945, 0.0
  %951 = vset.pattern.permute.xlu0 0
  %952 = vperm.xlu0 %951, %v677
  %v953 = vpop.permute.xlu0 %952
  %v956 = vsel %vm458, %v676, 0
  %958 = vmatpush.msra.mxu0 0.0
  %959 = vmatpush.msra.mxu0 0.0
  %960 = vmatpush.msra.mxu0 0.0
  %961 = vmatpush.msra.mxu0 0.0
  %962 = vmatpush.msra.mxu0 0.0
  %963 = vmatpush.msra.mxu0 0.0
  %964 = vmatpush.msra.mxu0 0.0
  %965 = vmatpush.msra.mxu0 %v946
  %966 = vmatpush.msra.mxu0 %v925
  %967 = vmatpush.msra.mxu0 %v904
  %968 = vmatpush.msra.mxu0 %v883
  %969 = vmatpush.msra.mxu0 %v774
  %970 = vmatpush.msra.mxu0 %v862
  %971 = vmatpush.msra.mxu0 %v841
  %972 = vmatpush.msra.mxu0 %v820
  %973 = vmatpush.msra.mxu0 %v799
  %974 = vmatmul.f32.gmra.mxu0 %v956
  %v975 = vpop.f32.mrf.mxu0
  %v976 = vadd.f32 %v953, %v975
  %977 = vdwg.mxu0
  %978 = vmatpush.msra.mxu0 0.0
  %979 = vmatpush.msra.mxu0 0.0
  %980 = vmatpush.msra.mxu0 0.0
  %981 = vmatpush.msra.mxu0 0.0
  %982 = vmatpush.msra.mxu0 0.0
  %983 = vmatpush.msra.mxu0 0.0
  %984 = vmatpush.msra.mxu0 0.0
  %985 = vmatpush.msra.mxu0 %v947
  %986 = vmatpush.msra.mxu0 %v926
  %987 = vmatpush.msra.mxu0 %v905
  %988 = vmatpush.msra.mxu0 %v884
  %989 = vmatpush.msra.mxu0 %v775
  %990 = vmatpush.msra.mxu0 %v863
  %991 = vmatpush.msra.mxu0 %v842
  %992 = vmatpush.msra.mxu0 %v821
  %993 = vmatpush.msra.mxu0 %v800
  %994 = vmatmul.f32.gmra.mxu0 %v956
  %v995 = vpop.f32.mrf.mxu0
  %v996 = vadd.f32 %v953, %v995
  %997 = vdwg.mxu0
  %998 = vmatpush.msra.mxu0 0.0
  %999 = vmatpush.msra.mxu0 0.0
  %1000 = vmatpush.msra.mxu0 0.0
  %1001 = vmatpush.msra.mxu0 0.0
  %1002 = vmatpush.msra.mxu0 0.0
  %1003 = vmatpush.msra.mxu0 0.0
  %1004 = vmatpush.msra.mxu0 0.0
  %1005 = vmatpush.msra.mxu0 %v948
  %1006 = vmatpush.msra.mxu0 %v927
  %1007 = vmatpush.msra.mxu0 %v906
  %1008 = vmatpush.msra.mxu0 %v885
  %1009 = vmatpush.msra.mxu0 %v776
  %1010 = vmatpush.msra.mxu0 %v864
  %1011 = vmatpush.msra.mxu0 %v843
  %1012 = vmatpush.msra.mxu0 %v822
  %1013 = vmatpush.msra.mxu0 %v801
  %1014 = vmatmul.f32.gmra.mxu0 %v956
  %v1015 = vpop.f32.mrf.mxu0
  %v1016 = vadd.f32 %v953, %v1015
  %1017 = vdwg.mxu0
  %1018 = vmatpush.msra.mxu0 0.0
  %1019 = vmatpush.msra.mxu0 0.0
  %1020 = vmatpush.msra.mxu0 0.0
  %1021 = vmatpush.msra.mxu0 0.0
  %1022 = vmatpush.msra.mxu0 0.0
  %1023 = vmatpush.msra.mxu0 0.0
  %1024 = vmatpush.msra.mxu0 0.0
  %1025 = vmatpush.msra.mxu0 %v949
  %1026 = vmatpush.msra.mxu0 %v928
  %1027 = vmatpush.msra.mxu0 %v907
  %1028 = vmatpush.msra.mxu0 %v886
  %1029 = vmatpush.msra.mxu0 %v777
  %1030 = vmatpush.msra.mxu0 %v865
  %1031 = vmatpush.msra.mxu0 %v844
  %1032 = vmatpush.msra.mxu0 %v823
  %1033 = vmatpush.msra.mxu0 %v802
  %1034 = vmatmul.f32.gmra.mxu0 %v956
  %v1035 = vpop.f32.mrf.mxu0
  %v1036 = vadd.f32 %v953, %v1035
  %1037 = vdwg.mxu0
  %v1038 = vmul.f32 %v976, 0.2
  %v1039 = vmul.f32 %v996, 0.2
  %v1040 = vmul.f32 %v1016, 0.2
  %v1041 = vmul.f32 %v1036, 0.2
  %v1042 = vmax.f32 %v976, %v1038
  %v1043 = vmax.f32 %v996, %v1039
  %v1044 = vmax.f32 %v1016, %v1040
  %v1045 = vmax.f32 %v1036, %v1041
  %v1047 = vsel %vm87, %v678, 0
  %v1050 = vsel %vm87, %v679, 0
  %1052 = vmatpush.msra.mxu0 0.0
  %1053 = vmatpush.msra.mxu0 0.0
  %1054 = vmatpush.msra.mxu0 0.0
  %1055 = vmatpush.msra.mxu0 0.0
  %1056 = vmatpush.msra.mxu0 0.0
  %1057 = vmatpush.msra.mxu0 0.0
  %1058 = vmatpush.msra.mxu0 0.0
  %1059 = vmatpush.msra.mxu0 0.0
  %1060 = vmatpush.msra.mxu0 0.0
  %1061 = vmatpush.msra.mxu0 0.0
  %1062 = vmatpush.msra.mxu0 0.0
  %1063 = vmatpush.msra.mxu0 0.0
  %1064 = vmatpush.msra.mxu0 0.0
  %1065 = vmatpush.msra.mxu0 0.0
  %1066 = vmatpush.msra.mxu0 0.0
  %1067 = vmatpush.msra.mxu0 %v1042
  %1068 = vmatmul.f32.gmra.mxu0 %v1047
  %v1069 = vpop.f32.mrf.mxu0
  %v1070 = vadd.f32 0.0, %v1069
  %1071 = vmatmul.f32.gmra.mxu0 %v1050
  %v1072 = vpop.f32.mrf.mxu0
  %v1073 = vadd.f32 0.0, %v1072
  %1074 = vdwg.mxu0
  %1075 = vmatpush.msra.mxu0 0.0
  %1076 = vmatpush.msra.mxu0 0.0
  %1077 = vmatpush.msra.mxu0 0.0
  %1078 = vmatpush.msra.mxu0 0.0
  %1079 = vmatpush.msra.mxu0 0.0
  %1080 = vmatpush.msra.mxu0 0.0
  %1081 = vmatpush.msra.mxu0 0.0
  %1082 = vmatpush.msra.mxu0 0.0
  %1083 = vmatpush.msra.mxu0 0.0
  %1084 = vmatpush.msra.mxu0 0.0
  %1085 = vmatpush.msra.mxu0 0.0
  %1086 = vmatpush.msra.mxu0 0.0
  %1087 = vmatpush.msra.mxu0 0.0
  %1088 = vmatpush.msra.mxu0 0.0
  %1089 = vmatpush.msra.mxu0 0.0
  %1090 = vmatpush.msra.mxu0 %v1043
  %1091 = vmatmul.f32.gmra.mxu0 %v1047
  %v1092 = vpop.f32.mrf.mxu0
  %v1093 = vadd.f32 0.0, %v1092
  %1094 = vmatmul.f32.gmra.mxu0 %v1050
  %v1095 = vpop.f32.mrf.mxu0
  %v1096 = vadd.f32 0.0, %v1095
  %1097 = vdwg.mxu0
  %1098 = vmatpush.msra.mxu0 0.0
  %1099 = vmatpush.msra.mxu0 0.0
  %1100 = vmatpush.msra.mxu0 0.0
  %1101 = vmatpush.msra.mxu0 0.0
  %1102 = vmatpush.msra.mxu0 0.0
  %1103 = vmatpush.msra.mxu0 0.0
  %1104 = vmatpush.msra.mxu0 0.0
  %1105 = vmatpush.msra.mxu0 0.0
  %1106 = vmatpush.msra.mxu0 0.0
  %1107 = vmatpush.msra.mxu0 0.0
  %1108 = vmatpush.msra.mxu0 0.0
  %1109 = vmatpush.msra.mxu0 0.0
  %1110 = vmatpush.msra.mxu0 0.0
  %1111 = vmatpush.msra.mxu0 0.0
  %1112 = vmatpush.msra.mxu0 0.0
  %1113 = vmatpush.msra.mxu0 %v1044
  %1114 = vmatmul.f32.gmra.mxu0 %v1047
  %v1115 = vpop.f32.mrf.mxu0
  %v1116 = vadd.f32 0.0, %v1115
  %1117 = vmatmul.f32.gmra.mxu0 %v1050
  %v1118 = vpop.f32.mrf.mxu0
  %v1119 = vadd.f32 0.0, %v1118
  %1120 = vdwg.mxu0
  %1121 = vmatpush.msra.mxu0 0.0
  %1122 = vmatpush.msra.mxu0 0.0
  %1123 = vmatpush.msra.mxu0 0.0
  %1124 = vmatpush.msra.mxu0 0.0
  %1125 = vmatpush.msra.mxu0 0.0
  %1126 = vmatpush.msra.mxu0 0.0
  %1127 = vmatpush.msra.mxu0 0.0
  %1128 = vmatpush.msra.mxu0 0.0
  %1129 = vmatpush.msra.mxu0 0.0
  %1130 = vmatpush.msra.mxu0 0.0
  %1131 = vmatpush.msra.mxu0 0.0
  %1132 = vmatpush.msra.mxu0 0.0
  %1133 = vmatpush.msra.mxu0 0.0
  %1134 = vmatpush.msra.mxu0 0.0
  %1135 = vmatpush.msra.mxu0 0.0
  %1136 = vmatpush.msra.mxu0 %v1045
  %1137 = vmatmul.f32.gmra.mxu0 %v1047
  %v1138 = vpop.f32.mrf.mxu0
  %v1139 = vadd.f32 0.0, %v1138
  %1140 = vmatmul.f32.gmra.mxu0 %v1050
  %v1141 = vpop.f32.mrf.mxu0
  %v1142 = vadd.f32 0.0, %v1141
  %1143 = vdwg.mxu0
  %v1144 = vadd.f32 %v666, %v1070
  %v1145 = vadd.f32 %v667, %v1093
  %v1146 = vadd.f32 %v668, %v1116
  %v1147 = vadd.f32 %v669, %v1139
  %v1148 = vadd.f32 %v670, %v1073
  %v1149 = vadd.f32 %v671, %v1096
  %v1150 = vadd.f32 %v672, %v1119
  %v1151 = vadd.f32 %v673, %v1142
  %1153 = vset.pattern.permute.xlu0 0
  %1154 = vperm.xlu0 %1153, %v680
  %v1155 = vpop.permute.xlu0 %1154
  %1158 = vset.pattern.permute.xlu0 0
  %1159 = vperm.xlu0 %1158, %v681
  %v1160 = vpop.permute.xlu0 %1159
  %v1162 = vadd.f32 %v1144, %v1155
  %v1163 = vadd.f32 %v1145, %v1155
  %v1164 = vadd.f32 %v1146, %v1155
  %v1165 = vadd.f32 %v1147, %v1155
  %v1166 = vadd.f32 %v1148, %v1160
  %v1167 = vadd.f32 %v1149, %v1160
  %v1168 = vadd.f32 %v1150, %v1160
  %v1169 = vadd.f32 %v1151, %v1160
  %v1170 = vld [vmem:[%s1 + $0xa0] sm:$0xff]
  %v1171 = vld [vmem:[%s1 + $0xa8] sm:$0xff]
  %v1172 = vld [vmem:[%s1 + $0xb0] sm:$0xff]
  %v1173 = vld [vmem:[%s1 + $0xb8] sm:$0xff]
  %v1174 = vld [vmem:[%s1 + $0xc0] sm:$0xff]
  %v1175 = vld [vmem:[%s1 + $0xc8] sm:$0xff]
  %v1176 = vld [vmem:[%s1 + $0xd0] sm:$0xff]
  %v1177 = vld [vmem:[%s1 + $0xd8] sm:$0xff]
  %1179 = vset.pattern.permute.xlu0 0
  %1180 = vperm.xlu0 %1179, %v1171
  %v1181 = vpop.permute.xlu0 %1180
  %v1184 = vsel %vm252, %v1170, 0
  %1186 = vmatpush.msra.mxu0 0.0
  %1187 = vmatpush.msra.mxu0 0.0
  %1188 = vmatpush.msra.mxu0 0.0
  %1189 = vmatpush.msra.mxu0 0.0
  %1190 = vmatpush.msra.mxu0 0.0
  %1191 = vmatpush.msra.mxu0 0.0
  %1192 = vmatpush.msra.mxu0 0.0
  %1193 = vmatpush.msra.mxu0 0.0
  %1194 = vmatpush.msra.mxu0 0.0
  %1195 = vmatpush.msra.mxu0 0.0
  %1196 = vmatpush.msra.mxu0 0.0
  %1197 = vmatpush.msra.mxu0 0.0
  %1198 = vmatpush.msra.mxu0 0.0
  %1199 = vmatpush.msra.mxu0 0.0
  %1200 = vmatpush.msra.mxu0 %v1166
  %1201 = vmatpush.msra.mxu0 %v1162
  %1202 = vmatmul.f32.gmra.mxu0 %v1184
  %v1203 = vpop.f32.mrf.mxu0
  %v1204 = vadd.f32 %v1181, %v1203
  %1205 = vdwg.mxu0
  %1206 = vmatpush.msra.mxu0 0.0
  %1207 = vmatpush.msra.mxu0 0.0
  %1208 = vmatpush.msra.mxu0 0.0
  %1209 = vmatpush.msra.mxu0 0.0
  %1210 = vmatpush.msra.mxu0 0.0
  %1211 = vmatpush.msra.mxu0 0.0
  %1212 = vmatpush.msra.mxu0 0.0
  %1213 = vmatpush.msra.mxu0 0.0
  %1214 = vmatpush.msra.mxu0 0.0
  %1215 = vmatpush.msra.mxu0 0.0
  %1216 = vmatpush.msra.mxu0 0.0
  %1217 = vmatpush.msra.mxu0 0.0
  %1218 = vmatpush.msra.mxu0 0.0
  %1219 = vmatpush.msra.mxu0 0.0
  %1220 = vmatpush.msra.mxu0 %v1167
  %1221 = vmatpush.msra.mxu0 %v1163
  %1222 = vmatmul.f32.gmra.mxu0 %v1184
  %v1223 = vpop.f32.mrf.mxu0
  %v1224 = vadd.f32 %v1181, %v1223
  %1225 = vdwg.mxu0
  %1226 = vmatpush.msra.mxu0 0.0
  %1227 = vmatpush.msra.mxu0 0.0
  %1228 = vmatpush.msra.mxu0 0.0
  %1229 = vmatpush.msra.mxu0 0.0
  %1230 = vmatpush.msra.mxu0 0.0
  %1231 = vmatpush.msra.mxu0 0.0
  %1232 = vmatpush.msra.mxu0 0.0
  %1233 = vmatpush.msra.mxu0 0.0
  %1234 = vmatpush.msra.mxu0 0.0
  %1235 = vmatpush.msra.mxu0 0.0
  %1236 = vmatpush.msra.mxu0 0.0
  %1237 = vmatpush.msra.mxu0 0.0
  %1238 = vmatpush.msra.mxu0 0.0
  %1239 = vmatpush.msra.mxu0 0.0
  %1240 = vmatpush.msra.mxu0 %v1168
  %1241 = vmatpush.msra.mxu0 %v1164
  %1242 = vmatmul.f32.gmra.mxu0 %v1184
  %v1243 = vpop.f32.mrf.mxu0
  %v1244 = vadd.f32 %v1181, %v1243
  %1245 = vdwg.mxu0
  %1246 = vmatpush.msra.mxu0 0.0
  %1247 = vmatpush.msra.mxu0 0.0
  %1248 = vmatpush.msra.mxu0 0.0
  %1249 = vmatpush.msra.mxu0 0.0
  %1250 = vmatpush.msra.mxu0 0.0
  %1251 = vmatpush.msra.mxu0 0.0
  %1252 = vmatpush.msra.mxu0 0.0
  %1253 = vmatpush.msra.mxu0 0.0
  %1254 = vmatpush.msra.mxu0 0.0
  %1255 = vmatpush.msra.mxu0 0.0
  %1256 = vmatpush.msra.mxu0 0.0
  %1257 = vmatpush.msra.mxu0 0.0
  %1258 = vmatpush.msra.mxu0 0.0
  %1259 = vmatpush.msra.mxu0 0.0
  %1260 = vmatpush.msra.mxu0 %v1169
  %1261 = vmatpush.msra.mxu0 %v1165
  %1262 = vmatmul.f32.gmra.mxu0 %v1184
  %v1263 = vpop.f32.mrf.mxu0
  %v1264 = vadd.f32 %v1181, %v1263
  %1265 = vdwg.mxu0
  %v1266 = vmul.f32 %v1204, 0.2
  %v1267 = vmul.f32 %v1224, 0.2
  %v1268 = vmul.f32 %v1244, 0.2
  %v1269 = vmul.f32 %v1264, 0.2
  %v1270 = vmax.f32 %v1204, %v1266
  %v1271 = vmax.f32 %v1224, %v1267
  %v1272 = vmax.f32 %v1244, %v1268
  %v1273 = vmax.f32 %v1264, %v1269
  %1275 = vrot.lane.b32.xlu0 %v1273, 17
  %v1276 = vpop.permute.xlu0 %1275
  %1281 = vrot.lane.b32.xlu0 %v1270, 17
  %v1282 = vpop.permute.xlu0 %1281
  %1283 = vrot.lane.b32.xlu0 %v1271, 17
  %v1284 = vpop.permute.xlu0 %1283
  %1285 = vrot.lane.b32.xlu0 %v1272, 17
  %v1286 = vpop.permute.xlu0 %1285
  %v1287 = vsel %vm222, %v1282, %v1284
  %v1288 = vsel %vm222, %v1284, %v1286
  %v1289 = vsel %vm222, %v1286, %v1276
  %v1294 = vsel %vm222, %v1276, %v1282
  %v1295 = vsel %vm235, %v1294, 0.0
  %v1296 = vsel %vm236, %v1287, 0.0
  %v1297 = vsel %vm237, %v1288, 0.0
  %v1298 = vsel %vm238, %v1289, 0.0
  %1299 = vrot.lane.b32.xlu0 %v1273, 16
  %v1300 = vpop.permute.xlu0 %1299
  %1302 = vrot.lane.b32.xlu0 %v1270, 16
  %v1303 = vpop.permute.xlu0 %1302
  %1304 = vrot.lane.b32.xlu0 %v1271, 16
  %v1305 = vpop.permute.xlu0 %1304
  %1306 = vrot.lane.b32.xlu0 %v1272, 16
  %v1307 = vpop.permute.xlu0 %1306
  %v1308 = vsel %vm252, %v1303, %v1305
  %v1309 = vsel %vm252, %v1305, %v1307
  %v1310 = vsel %vm252, %v1307, %v1300
  %v1315 = vsel %vm252, %v1300, %v1303
  %v1316 = vsel %vm265, %v1315, 0.0
  %v1317 = vsel %vm266, %v1308, 0.0
  %v1318 = vsel %vm267, %v1309, 0.0
  %v1319 = vsel %vm268, %v1310, 0.0
  %1320 = vrot.lane.b32.xlu0 %v1273, 15
  %v1321 = vpop.permute.xlu0 %1320
  %1323 = vrot.lane.b32.xlu0 %v1270, 15
  %v1324 = vpop.permute.xlu0 %1323
  %1325 = vrot.lane.b32.xlu0 %v1271, 15
  %v1326 = vpop.permute.xlu0 %1325
  %1327 = vrot.lane.b32.xlu0 %v1272, 15
  %v1328 = vpop.permute.xlu0 %1327
  %v1329 = vsel %vm282, %v1324, %v1326
  %v1330 = vsel %vm282, %v1326, %v1328
  %v1331 = vsel %vm282, %v1328, %v1321
  %v1336 = vsel %vm282, %v1321, %v1324
  %v1337 = vsel %vm295, %v1336, 0.0
  %v1338 = vsel %vm296, %v1329, 0.0
  %v1339 = vsel %vm297, %v1330, 0.0
  %v1340 = vsel %vm298, %v1331, 0.0
  %1341 = vrot.lane.b32.xlu0 %v1273, 1
  %v1342 = vpop.permute.xlu0 %1341
  %1344 = vrot.lane.b32.xlu0 %v1270, 1
  %v1345 = vpop.permute.xlu0 %1344
  %1346 = vrot.lane.b32.xlu0 %v1271, 1
  %v1347 = vpop.permute.xlu0 %1346
  %1348 = vrot.lane.b32.xlu0 %v1272, 1
  %v1349 = vpop.permute.xlu0 %1348
  %v1350 = vsel %vm312, %v1345, %v1347
  %v1351 = vsel %vm312, %v1347, %v1349
  %v1352 = vsel %vm312, %v1349, %v1342
  %v1357 = vsel %vm312, %v1342, %v1345
  %v1358 = vsel %vm325, %v1357, 0.0
  %v1359 = vsel %vm326, %v1350, 0.0
  %v1360 = vsel %vm327, %v1351, 0.0
  %v1361 = vsel %vm328, %v1352, 0.0
  %1362 = vrot.lane.b32.xlu0 %v1270, 127
  %v1363 = vpop.permute.xlu0 %1362
  %1364 = vrot.lane.b32.xlu0 %v1271, 127
  %v1365 = vpop.permute.xlu0 %1364
  %1366 = vrot.lane.b32.xlu0 %v1272, 127
  %v1367 = vpop.permute.xlu0 %1366
  %1368 = vrot.lane.b32.xlu0 %v1273, 127
  %v1369 = vpop.permute.xlu0 %1368
  %v1370 = vsel %vm341, %v1363, %v1365
  %v1371 = vsel %vm341, %v1365, %v1367
  %v1372 = vsel %vm341, %v1367, %v1369
  %v1378 = vsel %vm341, %v1369, %v1363
  %v1379 = vsel %vm355, %v1370, 0.0
  %v1380 = vsel %vm356, %v1371, 0.0
  %v1381 = vsel %vm357, %v1372, 0.0
  %v1382 = vsel %vm358, %v1378, 0.0
  %1383 = vrot.lane.b32.xlu0 %v1270, 113
  %v1384 = vpop.permute.xlu0 %1383
  %1385 = vrot.lane.b32.xlu0 %v1271, 113
  %v1386 = vpop.permute.xlu0 %1385
  %1387 = vrot.lane.b32.xlu0 %v1272, 113
  %v1388 = vpop.permute.xlu0 %1387
  %1389 = vrot.lane.b32.xlu0 %v1273, 113
  %v1390 = vpop.permute.xlu0 %1389
  %v1391 = vsel %vm371, %v1384, %v1386
  %v1392 = vsel %vm371, %v1386, %v1388
  %v1393 = vsel %vm371, %v1388, %v1390
  %v1399 = vsel %vm371, %v1390, %v1384
  %v1400 = vsel %vm385, %v1391, 0.0
  %v1401 = vsel %vm386, %v1392, 0.0
  %v1402 = vsel %vm387, %v1393, 0.0
  %v1403 = vsel %vm388, %v1399, 0.0
  %1404 = vrot.lane.b32.xlu0 %v1270, 112
  %v1405 = vpop.permute.xlu0 %1404
  %1406 = vrot.lane.b32.xlu0 %v1271, 112
  %v1407 = vpop.permute.xlu0 %1406
  %1408 = vrot.lane.b32.xlu0 %v1272, 112
  %v1409 = vpop.permute.xlu0 %1408
  %1410 = vrot.lane.b32.xlu0 %v1273, 112
  %v1411 = vpop.permute.xlu0 %1410
  %v1412 = vsel %vm401, %v1405, %v1407
  %v1413 = vsel %vm401, %v1407, %v1409
  %v1414 = vsel %vm401, %v1409, %v1411
  %v1420 = vsel %vm401, %v1411, %v1405
  %v1421 = vsel %vm415, %v1412, 0.0
  %v1422 = vsel %vm416, %v1413, 0.0
  %v1423 = vsel %vm417, %v1414, 0.0
  %v1424 = vsel %vm418, %v1420, 0.0
  %1425 = vrot.lane.b32.xlu0 %v1270, 111
  %v1426 = vpop.permute.xlu0 %1425
  %1427 = vrot.lane.b32.xlu0 %v1271, 111
  %v1428 = vpop.permute.xlu0 %1427
  %1429 = vrot.lane.b32.xlu0 %v1272, 111
  %v1430 = vpop.permute.xlu0 %1429
  %1431 = vrot.lane.b32.xlu0 %v1273, 111
  %v1432 = vpop.permute.xlu0 %1431
  %v1433 = vsel %vm431, %v1426, %v1428
  %v1434 = vsel %vm431, %v1428, %v1430
  %v1435 = vsel %vm431, %v1430, %v1432
  %v1441 = vsel %vm431, %v1432, %v1426
  %v1442 = vsel %vm445, %v1433, 0.0
  %v1443 = vsel %vm446, %v1434, 0.0
  %v1444 = vsel %vm447, %v1435, 0.0
  %v1445 = vsel %vm448, %v1441, 0.0
  %1447 = vset.pattern.permute.xlu0 0
  %1448 = vperm.xlu0 %1447, %v1173
  %v1449 = vpop.permute.xlu0 %1448
  %v1452 = vsel %vm458, %v1172, 0
  %1454 = vmatpush.msra.mxu0 0.0
  %1455 = vmatpush.msra.mxu0 0.0
  %1456 = vmatpush.msra.mxu0 0.0
  %1457 = vmatpush.msra.mxu0 0.0
  %1458 = vmatpush.msra.mxu0 0.0
  %1459 = vmatpush.msra.mxu0 0.0
  %1460 = vmatpush.msra.mxu0 0.0
  %1461 = vmatpush.msra.mxu0 %v1442
  %1462 = vmatpush.msra.mxu0 %v1421
  %1463 = vmatpush.msra.mxu0 %v1400
  %1464 = vmatpush.msra.mxu0 %v1379
  %1465 = vmatpush.msra.mxu0 %v1270
  %1466 = vmatpush.msra.mxu0 %v1358
  %1467 = vmatpush.msra.mxu0 %v1337
  %1468 = vmatpush.msra.mxu0 %v1316
  %1469 = vmatpush.msra.mxu0 %v1295
  %1470 = vmatmul.f32.gmra.mxu0 %v1452
  %v1471 = vpop.f32.mrf.mxu0
  %v1472 = vadd.f32 %v1449, %v1471
  %1473 = vdwg.mxu0
  %1474 = vmatpush.msra.mxu0 0.0
  %1475 = vmatpush.msra.mxu0 0.0
  %1476 = vmatpush.msra.mxu0 0.0
  %1477 = vmatpush.msra.mxu0 0.0
  %1478 = vmatpush.msra.mxu0 0.0
  %1479 = vmatpush.msra.mxu0 0.0
  %1480 = vmatpush.msra.mxu0 0.0
  %1481 = vmatpush.msra.mxu0 %v1443
  %1482 = vmatpush.msra.mxu0 %v1422
  %1483 = vmatpush.msra.mxu0 %v1401
  %1484 = vmatpush.msra.mxu0 %v1380
  %1485 = vmatpush.msra.mxu0 %v1271
  %1486 = vmatpush.msra.mxu0 %v1359
  %1487 = vmatpush.msra.mxu0 %v1338
  %1488 = vmatpush.msra.mxu0 %v1317
  %1489 = vmatpush.msra.mxu0 %v1296
  %1490 = vmatmul.f32.gmra.mxu0 %v1452
  %v1491 = vpop.f32.mrf.mxu0
  %v1492 = vadd.f32 %v1449, %v1491
  %1493 = vdwg.mxu0
  %1494 = vmatpush.msra.mxu0 0.0
  %1495 = vmatpush.msra.mxu0 0.0
  %1496 = vmatpush.msra.mxu0 0.0
  %1497 = vmatpush.msra.mxu0 0.0
  %1498 = vmatpush.msra.mxu0 0.0
  %1499 = vmatpush.msra.mxu0 0.0
  %1500 = vmatpush.msra.mxu0 0.0
  %1501 = vmatpush.msra.mxu0 %v1444
  %1502 = vmatpush.msra.mxu0 %v1423
  %1503 = vmatpush.msra.mxu0 %v1402
  %1504 = vmatpush.msra.mxu0 %v1381
  %1505 = vmatpush.msra.mxu0 %v1272
  %1506 = vmatpush.msra.mxu0 %v1360
  %1507 = vmatpush.msra.mxu0 %v1339
  %1508 = vmatpush.msra.mxu0 %v1318
  %1509 = vmatpush.msra.mxu0 %v1297
  %1510 = vmatmul.f32.gmra.mxu0 %v1452
  %v1511 = vpop.f32.mrf.mxu0
  %v1512 = vadd.f32 %v1449, %v1511
  %1513 = vdwg.mxu0
  %1514 = vmatpush.msra.mxu0 0.0
  %1515 = vmatpush.msra.mxu0 0.0
  %1516 = vmatpush.msra.mxu0 0.0
  %1517 = vmatpush.msra.mxu0 0.0
  %1518 = vmatpush.msra.mxu0 0.0
  %1519 = vmatpush.msra.mxu0 0.0
  %1520 = vmatpush.msra.mxu0 0.0
  %1521 = vmatpush.msra.mxu0 %v1445
  %1522 = vmatpush.msra.mxu0 %v1424
  %1523 = vmatpush.msra.mxu0 %v1403
  %1524 = vmatpush.msra.mxu0 %v1382
  %1525 = vmatpush.msra.mxu0 %v1273
  %1526 = vmatpush.msra.mxu0 %v1361
  %1527 = vmatpush.msra.mxu0 %v1340
  %1528 = vmatpush.msra.mxu0 %v1319
  %1529 = vmatpush.msra.mxu0 %v1298
  %1530 = vmatmul.f32.gmra.mxu0 %v1452
  %v1531 = vpop.f32.mrf.mxu0
  %v1532 = vadd.f32 %v1449, %v1531
  %1533 = vdwg.mxu0
  %v1534 = vmul.f32 %v1472, 0.2
  %v1535 = vmul.f32 %v1492, 0.2
  %v1536 = vmul.f32 %v1512, 0.2
  %v1537 = vmul.f32 %v1532, 0.2
  %v1538 = vmax.f32 %v1472, %v1534
  %v1539 = vmax.f32 %v1492, %v1535
  %v1540 = vmax.f32 %v1512, %v1536
  %v1541 = vmax.f32 %v1532, %v1537
  %v1543 = vsel %vm87, %v1174, 0
  %v1546 = vsel %vm87, %v1175, 0
  %1548 = vmatpush.msra.mxu0 0.0
  %1549 = vmatpush.msra.mxu0 0.0
  %1550 = vmatpush.msra.mxu0 0.0
  %1551 = vmatpush.msra.mxu0 0.0
  %1552 = vmatpush.msra.mxu0 0.0
  %1553 = vmatpush.msra.mxu0 0.0
  %1554 = vmatpush.msra.mxu0 0.0
  %1555 = vmatpush.msra.mxu0 0.0
  %1556 = vmatpush.msra.mxu0 0.0
  %1557 = vmatpush.msra.mxu0 0.0
  %1558 = vmatpush.msra.mxu0 0.0
  %1559 = vmatpush.msra.mxu0 0.0
  %1560 = vmatpush.msra.mxu0 0.0
  %1561 = vmatpush.msra.mxu0 0.0
  %1562 = vmatpush.msra.mxu0 0.0
  %1563 = vmatpush.msra.mxu0 %v1538
  %1564 = vmatmul.f32.gmra.mxu0 %v1543
  %v1565 = vpop.f32.mrf.mxu0
  %v1566 = vadd.f32 0.0, %v1565
  %1567 = vmatmul.f32.gmra.mxu0 %v1546
  %v1568 = vpop.f32.mrf.mxu0
  %v1569 = vadd.f32 0.0, %v1568
  %1570 = vdwg.mxu0
  %1571 = vmatpush.msra.mxu0 0.0
  %1572 = vmatpush.msra.mxu0 0.0
  %1573 = vmatpush.msra.mxu0 0.0
  %1574 = vmatpush.msra.mxu0 0.0
  %1575 = vmatpush.msra.mxu0 0.0
  %1576 = vmatpush.msra.mxu0 0.0
  %1577 = vmatpush.msra.mxu0 0.0
  %1578 = vmatpush.msra.mxu0 0.0
  %1579 = vmatpush.msra.mxu0 0.0
  %1580 = vmatpush.msra.mxu0 0.0
  %1581 = vmatpush.msra.mxu0 0.0
  %1582 = vmatpush.msra.mxu0 0.0
  %1583 = vmatpush.msra.mxu0 0.0
  %1584 = vmatpush.msra.mxu0 0.0
  %1585 = vmatpush.msra.mxu0 0.0
  %1586 = vmatpush.msra.mxu0 %v1539
  %1587 = vmatmul.f32.gmra.mxu0 %v1543
  %v1588 = vpop.f32.mrf.mxu0
  %v1589 = vadd.f32 0.0, %v1588
  %1590 = vmatmul.f32.gmra.mxu0 %v1546
  %v1591 = vpop.f32.mrf.mxu0
  %v1592 = vadd.f32 0.0, %v1591
  %1593 = vdwg.mxu0
  %1594 = vmatpush.msra.mxu0 0.0
  %1595 = vmatpush.msra.mxu0 0.0
  %1596 = vmatpush.msra.mxu0 0.0
  %1597 = vmatpush.msra.mxu0 0.0
  %1598 = vmatpush.msra.mxu0 0.0
  %1599 = vmatpush.msra.mxu0 0.0
  %1600 = vmatpush.msra.mxu0 0.0
  %1601 = vmatpush.msra.mxu0 0.0
  %1602 = vmatpush.msra.mxu0 0.0
  %1603 = vmatpush.msra.mxu0 0.0
  %1604 = vmatpush.msra.mxu0 0.0
  %1605 = vmatpush.msra.mxu0 0.0
  %1606 = vmatpush.msra.mxu0 0.0
  %1607 = vmatpush.msra.mxu0 0.0
  %1608 = vmatpush.msra.mxu0 0.0
  %1609 = vmatpush.msra.mxu0 %v1540
  %1610 = vmatmul.f32.gmra.mxu0 %v1543
  %v1611 = vpop.f32.mrf.mxu0
  %v1612 = vadd.f32 0.0, %v1611
  %1613 = vmatmul.f32.gmra.mxu0 %v1546
  %v1614 = vpop.f32.mrf.mxu0
  %v1615 = vadd.f32 0.0, %v1614
  %1616 = vdwg.mxu0
  %1617 = vmatpush.msra.mxu0 0.0
  %1618 = vmatpush.msra.mxu0 0.0
  %1619 = vmatpush.msra.mxu0 0.0
  %1620 = vmatpush.msra.mxu0 0.0
  %1621 = vmatpush.msra.mxu0 0.0
  %1622 = vmatpush.msra.mxu0 0.0
  %1623 = vmatpush.msra.mxu0 0.0
  %1624 = vmatpush.msra.mxu0 0.0
  %1625 = vmatpush.msra.mxu0 0.0
  %1626 = vmatpush.msra.mxu0 0.0
  %1627 = vmatpush.msra.mxu0 0.0
  %1628 = vmatpush.msra.mxu0 0.0
  %1629 = vmatpush.msra.mxu0 0.0
  %1630 = vmatpush.msra.mxu0 0.0
  %1631 = vmatpush.msra.mxu0 0.0
  %1632 = vmatpush.msra.mxu0 %v1541
  %1633 = vmatmul.f32.gmra.mxu0 %v1543
  %v1634 = vpop.f32.mrf.mxu0
  %v1635 = vadd.f32 0.0, %v1634
  %1636 = vmatmul.f32.gmra.mxu0 %v1546
  %v1637 = vpop.f32.mrf.mxu0
  %v1638 = vadd.f32 0.0, %v1637
  %1639 = vdwg.mxu0
  %v1640 = vadd.f32 %v1162, %v1566
  %v1641 = vadd.f32 %v1163, %v1589
  %v1642 = vadd.f32 %v1164, %v1612
  %v1643 = vadd.f32 %v1165, %v1635
  %v1644 = vadd.f32 %v1166, %v1569
  %v1645 = vadd.f32 %v1167, %v1592
  %v1646 = vadd.f32 %v1168, %v1615
  %v1647 = vadd.f32 %v1169, %v1638
  %1649 = vset.pattern.permute.xlu0 0
  %1650 = vperm.xlu0 %1649, %v1176
  %v1651 = vpop.permute.xlu0 %1650
  %1654 = vset.pattern.permute.xlu0 0
  %1655 = vperm.xlu0 %1654, %v1177
  %v1656 = vpop.permute.xlu0 %1655
  %v1658 = vadd.f32 %v1640, %v1651
  %v1659 = vadd.f32 %v1641, %v1651
  %v1660 = vadd.f32 %v1642, %v1651
  %v1661 = vadd.f32 %v1643, %v1651
  %v1662 = vadd.f32 %v1644, %v1656
  %v1663 = vadd.f32 %v1645, %v1656
  %v1664 = vadd.f32 %v1646, %v1656
  %v1665 = vadd.f32 %v1647, %v1656
  %1666 = vst [vmem:[%s2] sm:$0xff] %v1658
  %1667 = vst [vmem:[%s2 + $0x8] sm:$0xff] %v1659
  %1668 = vst [vmem:[%s2 + $0x10] sm:$0xff] %v1660
  %1669 = vst [vmem:[%s2 + $0x18] sm:$0xff] %v1661
  %1670 = vst [vmem:[%s2 + $0x20] sm:$0xff] %v1662
  %1671 = vst [vmem:[%s2 + $0x28] sm:$0xff] %v1663
  %1672 = vst [vmem:[%s2 + $0x30] sm:$0xff] %v1664
  %1673 = vst [vmem:[%s2 + $0x38] sm:$0xff] %v1665
  // Predicated region
  $region10: #{_lambda_.1} parent=0 // pred_check
    _
  $region11: #{_lambda_.1} parent=0 // pred_check_branch
    %1675 = sbr.rel (0) target = $region13
  $region12: #{_lambda_.1} parent=0 // pred_region
    _
  $region13: #{_lambda_.1} parent=0 // pred_fallthru
    _
  // Predicated region
  $region14: #{_lambda_.1} parent=0 // pred_check
    _
  $region15: #{_lambda_.1} parent=0 // pred_check_branch
    %1677 = sbr.rel (0) target = $region17
  $region16: #{_lambda_.1} parent=0 // pred_region
    _
  $region17: #{_lambda_.1} parent=0 // pred_fallthru
    _

</llo_original>
